<compile_context>
chip_gen: v6e
topology: v6e:2x2x1
jax: 0.10.0
libtpu: 0.0.40
codegen_flags: <defaults>
</compile_context>

<pallas_src>
import jax
import jax.numpy as jnp
from jax.experimental import pallas as pl
from jax.experimental.pallas import tpu as pltpu

D_IN = 1024          # DINOv2 ViT-L feature dim
D_H1 = 256
D_H2 = 128
NUM_CLASSES = 10
C_PAD = 128          # lane-dense padded logits width (multiple of 128)
EPS_BACKBONE = 1e-6  # DINOv2 norm eps
EPS_LN = 1e-5        # nn.LayerNorm default eps


def _round_up(x, m):
    return (x + m - 1) // m * m


def _layernorm_f32(x, gamma, beta, eps):
    mu = jnp.mean(x, axis=-1, keepdims=True)
    var = jnp.mean((x - mu) * (x - mu), axis=-1, keepdims=True)
    return (x - mu) * jax.lax.rsqrt(var + eps) * gamma + beta


def classifier_kernel(
    feat_ref,                      # (TB, 1024)  backbone features (f32)
    ng_ref, nb_ref,                # (1, 1024)   dino_model.norm gamma/beta (f32)
    w1_ref, b1_ref,                # (1024, 256) bf16, (1, 256) f32
    g1_ref, be1_ref,               # (1, 256)    LayerNorm(256) gamma/beta (f32)
    w2_ref, b2_ref,                # (256, 128)  bf16, (1, 128) f32
    w3_ref, b3_ref,                # (128, 128)  bf16 (zero-padded cols), (1, 128) f32
    out_ref,                       # (TB, 128)   padded logits (f32)
):
    x = feat_ref[...].astype(jnp.float32)

    # dino_model.norm : LayerNorm over the 1024 feature dim (f32 math)
    x = _layernorm_f32(x, ng_ref[...], nb_ref[...], EPS_BACKBONE)

    # Linear(1024, 256): bf16 operands, f32 MXU accumulation
    h = jnp.dot(x.astype(jnp.bfloat16), w1_ref[...],
                preferred_element_type=jnp.float32) + b1_ref[...]

    # LayerNorm(256) in f32
    h = _layernorm_f32(h, g1_ref[...], be1_ref[...], EPS_LN)

    # Linear(256, 128) + ReLU
    h = jnp.dot(h.astype(jnp.bfloat16), w2_ref[...],
                preferred_element_type=jnp.float32) + b2_ref[...]
    h = jnp.maximum(h, 0.0)

    # Linear(128, num_classes) padded to 128 lanes (unmasked lane-dense store)
    o = jnp.dot(h.astype(jnp.bfloat16), w3_ref[...],
                preferred_element_type=jnp.float32) + b3_ref[...]
    out_ref[...] = o.astype(out_ref.dtype)


def dino_classifier_head(features, params, *, max_tile=256):
    """features: (B, 1024) float32.  Returns (B, NUM_CLASSES) float32."""
    B = features.shape[0]
    # Sublane-aligned batch tile; fits comfortably in v7x's 64 MiB VMEM
    # (2x double-buffered 1 MiB feature tiles + ~0.7 MiB resident weights).
    tb = min(max_tile, _round_up(B, 8))
    padded_B = _round_up(B, tb)
    if padded_B != B:
        features = jnp.pad(features, ((0, padded_B - B), (0, 0)))
    n_tiles = padded_B // tb

    args = (
        features,
        params["norm_g"], params["norm_b"],
        params["w1"], params["b1"],
        params["ln_g"], params["ln_b"],
        params["w2"], params["b2"],
        params["w3"], params["b3"],
    )

    # Feature/output tiles indexed by the batch grid axis; all weights/params
    # use a constant index_map so they are fetched once and reused across tiles.
    feat_spec = pl.BlockSpec((tb, D_IN), lambda i: (i, 0))
    param_specs = [pl.BlockSpec(a.shape, lambda i: (0, 0)) for a in args[1:]]
    out_spec = pl.BlockSpec((tb, C_PAD), lambda i: (i, 0))

    flops = 2 * padded_B * (D_IN * D_H1 + D_H1 * D_H2 + D_H2 * C_PAD)
    weight_bytes = 2 * (D_IN * D_H1 + D_H1 * D_H2 + D_H2 * C_PAD)          # bf16
    small_param_bytes = 4 * (2 * D_IN + 3 * D_H1 + D_H2 + C_PAD)           # f32
    bytes_accessed = (4 * padded_B * D_IN + 4 * padded_B * C_PAD
                      + weight_bytes + small_param_bytes)
    cost = pl.CostEstimate(flops=flops,
                           transcendentals=2 * padded_B,
                           bytes_accessed=bytes_accessed)

    out = pl.pallas_call(
        classifier_kernel,
        out_shape=jax.ShapeDtypeStruct((padded_B, C_PAD), jnp.float32),
        grid=(n_tiles,),
        in_specs=[feat_spec] + param_specs,
        out_specs=out_spec,
        compiler_params=pltpu.CompilerParams(
            dimension_semantics=("parallel",)),
        cost_estimate=cost,
    )(*args)

    return out[:B, :NUM_CLASSES]


def init_params(key):
    ks = jax.random.split(key, 6)
    scale = 0.02
    w3 = scale * jax.random.normal(ks[4], (D_H2, NUM_CLASSES), jnp.float32)
    b3 = scale * jax.random.normal(ks[5], (1, NUM_CLASSES), jnp.float32)
    w3_pad = jnp.zeros((D_H2, C_PAD), jnp.float32).at[:, :NUM_CLASSES].set(w3)
    b3_pad = jnp.zeros((1, C_PAD), jnp.float32).at[:, :NUM_CLASSES].set(b3)
    return {
        # dino_model.norm
        "norm_g": jnp.ones((1, D_IN), jnp.float32),
        "norm_b": jnp.zeros((1, D_IN), jnp.float32),
        # Linear(1024, 256)  (stored as (in, out), bf16 weights)
        "w1": (scale * jax.random.normal(ks[0], (D_IN, D_H1), jnp.float32)
               ).astype(jnp.bfloat16),
        "b1": scale * jax.random.normal(ks[1], (1, D_H1), jnp.float32),
        # LayerNorm(256)
        "ln_g": jnp.ones((1, D_H1), jnp.float32),
        "ln_b": jnp.zeros((1, D_H1), jnp.float32),
        # Linear(256, 128)
        "w2": (scale * jax.random.normal(ks[2], (D_H1, D_H2), jnp.float32)
               ).astype(jnp.bfloat16),
        "b2": scale * jax.random.normal(ks[3], (1, D_H2), jnp.float32),
        # Linear(128, num_classes) padded to 128 output lanes
        "w3": w3_pad.astype(jnp.bfloat16),
        "b3": b3_pad,
    }


def reference(features, p):
    """Pure-JAX reference mirroring the kernel's dtype policy."""
    def ln(x, g, b, eps):
        mu = jnp.mean(x, axis=-1, keepdims=True)
        var = jnp.mean((x - mu) ** 2, axis=-1, keepdims=True)
        return (x - mu) / jnp.sqrt(var + eps) * g + b

    x = ln(features.astype(jnp.float32), p["norm_g"], p["norm_b"], EPS_BACKBONE)
    x = jnp.dot(x.astype(jnp.bfloat16), p["w1"],
                preferred_element_type=jnp.float32) + p["b1"]
    x = ln(x, p["ln_g"], p["ln_b"], EPS_LN)
    x = jnp.dot(x.astype(jnp.bfloat16), p["w2"],
                preferred_element_type=jnp.float32) + p["b2"]
    x = jnp.maximum(x, 0.0)
    x = jnp.dot(x.astype(jnp.bfloat16), p["w3"],
                preferred_element_type=jnp.float32) + p["b3"]
    return x[:, :NUM_CLASSES]


if __name__ == "__main__":
    key = jax.random.PRNGKey(0)
    k_feat, k_par = jax.random.split(key)

    B = 16  # small, sublane-aligned batch
    # Stand-in for dino_model(x): backbone output features (B, 1024).
    features = jax.random.normal(k_feat, (B, D_IN), jnp.float32)
    params = init_params(k_par)

    out = dino_classifier_head(features, params)
    out = jax.block_until_ready(out)

    ref = reference(features, params)
    assert out.shape == (B, NUM_CLASSES)
    assert jnp.allclose(out, ref, atol=5e-3, rtol=5e-3), "mismatch vs reference"
    print("KERNEL_OK")
</pallas_src>

<mosaic_0001>
module attributes {stable_mosaic.version = 11 : i64} {
  func.func @classifier_kernel(%arg0: i32, %arg1: memref<16x1024xf32, #tpu.memory_space<vmem>>, %arg2: memref<1x1024xf32, #tpu.memory_space<vmem>>, %arg3: memref<1x1024xf32, #tpu.memory_space<vmem>>, %arg4: memref<1024x256xbf16, #tpu.memory_space<vmem>>, %arg5: memref<1x256xf32, #tpu.memory_space<vmem>>, %arg6: memref<1x256xf32, #tpu.memory_space<vmem>>, %arg7: memref<1x256xf32, #tpu.memory_space<vmem>>, %arg8: memref<256x128xbf16, #tpu.memory_space<vmem>>, %arg9: memref<1x128xf32, #tpu.memory_space<vmem>>, %arg10: memref<128x128xbf16, #tpu.memory_space<vmem>>, %arg11: memref<1x128xf32, #tpu.memory_space<vmem>>, %arg12: memref<16x128xf32, #tpu.memory_space<vmem>>) attributes {dimension_semantics = [#tpu.dimension_semantics<parallel>], iteration_bounds = array<i64: 1>, scalar_prefetch = 0 : i64, scratch_operands = 0 : i64, tpu.core_type = #tpu.core_type<tc>, window_params = [{transform_indices = @transform_0, window_bounds = array<i64: 16, 1024>}, {pipeline_mode = #tpu.pipeline_mode<synchronous>, transform_indices = @transform_1, window_bounds = array<i64: 1, 1024>}, {pipeline_mode = #tpu.pipeline_mode<synchronous>, transform_indices = @transform_2, window_bounds = array<i64: 1, 1024>}, {pipeline_mode = #tpu.pipeline_mode<synchronous>, transform_indices = @transform_3, window_bounds = array<i64: 1024, 256>}, {pipeline_mode = #tpu.pipeline_mode<synchronous>, transform_indices = @transform_4, window_bounds = array<i64: 1, 256>}, {pipeline_mode = #tpu.pipeline_mode<synchronous>, transform_indices = @transform_5, window_bounds = array<i64: 1, 256>}, {pipeline_mode = #tpu.pipeline_mode<synchronous>, transform_indices = @transform_6, window_bounds = array<i64: 1, 256>}, {pipeline_mode = #tpu.pipeline_mode<synchronous>, transform_indices = @transform_7, window_bounds = array<i64: 256, 128>}, {pipeline_mode = #tpu.pipeline_mode<synchronous>, transform_indices = @transform_8, window_bounds = array<i64: 1, 128>}, {pipeline_mode = #tpu.pipeline_mode<synchronous>, transform_indices = @transform_9, window_bounds = array<i64: 128, 128>}, {pipeline_mode = #tpu.pipeline_mode<synchronous>, transform_indices = @transform_10, window_bounds = array<i64: 1, 128>}, {transform_indices = @transform_11, window_bounds = array<i64: 16, 128>}]} {
    %c0 = arith.constant 0 : index
    %c0_0 = arith.constant 0 : index
    %0 = vector.load %arg1[%c0, %c0_0] : memref<16x1024xf32, #tpu.memory_space<vmem>>, vector<16x1024xf32>
    %c0_1 = arith.constant 0 : index
    %c0_2 = arith.constant 0 : index
    %1 = vector.load %arg2[%c0_1, %c0_2] : memref<1x1024xf32, #tpu.memory_space<vmem>>, vector<1x1024xf32>
    %c0_3 = arith.constant 0 : index
    %c0_4 = arith.constant 0 : index
    %2 = vector.load %arg3[%c0_3, %c0_4] : memref<1x1024xf32, #tpu.memory_space<vmem>>, vector<1x1024xf32>
    %cst = arith.constant dense<0.000000e+00> : vector<16xf32>
    %3 = vector.multi_reduction <add>, %0, %cst [1] : vector<16x1024xf32> to vector<16xf32>
    %4 = vector.shape_cast %3 : vector<16xf32> to vector<16x1xf32>
    %cst_5 = arith.constant 1.024000e+03 : f32
    %5 = vector.broadcast %cst_5 : f32 to vector<16x1xf32>
    %6 = arith.divf %4, %5 : vector<16x1xf32>
    %7 = vector.broadcast %6 : vector<16x1xf32> to vector<16x1024xf32>
    %8 = arith.subf %0, %7 : vector<16x1024xf32>
    %9 = vector.broadcast %6 : vector<16x1xf32> to vector<16x1024xf32>
    %10 = arith.subf %0, %9 : vector<16x1024xf32>
    %11 = arith.mulf %8, %10 : vector<16x1024xf32>
    %cst_6 = arith.constant dense<0.000000e+00> : vector<16xf32>
    %12 = vector.multi_reduction <add>, %11, %cst_6 [1] : vector<16x1024xf32> to vector<16xf32>
    %13 = vector.shape_cast %12 : vector<16xf32> to vector<16x1xf32>
    %cst_7 = arith.constant 1.024000e+03 : f32
    %14 = vector.broadcast %cst_7 : f32 to vector<16x1xf32>
    %15 = arith.divf %13, %14 : vector<16x1xf32>
    %16 = vector.broadcast %6 : vector<16x1xf32> to vector<16x1024xf32>
    %17 = arith.subf %0, %16 : vector<16x1024xf32>
    %cst_8 = arith.constant 9.99999997E-7 : f32
    %18 = vector.broadcast %cst_8 : f32 to vector<16x1xf32>
    %19 = arith.addf %15, %18 : vector<16x1xf32>
    %20 = math.rsqrt %19 : vector<16x1xf32>
    %21 = vector.broadcast %20 : vector<16x1xf32> to vector<16x1024xf32>
    %22 = arith.mulf %17, %21 : vector<16x1024xf32>
    %23 = vector.broadcast %1 : vector<1x1024xf32> to vector<16x1024xf32>
    %24 = arith.mulf %22, %23 : vector<16x1024xf32>
    %25 = vector.broadcast %2 : vector<1x1024xf32> to vector<16x1024xf32>
    %26 = arith.addf %24, %25 : vector<16x1024xf32>
    %27 = arith.truncf %26 : vector<16x1024xf32> to vector<16x1024xbf16>
    %c0_9 = arith.constant 0 : index
    %c0_10 = arith.constant 0 : index
    %28 = vector.load %arg4[%c0_9, %c0_10] : memref<1024x256xbf16, #tpu.memory_space<vmem>>, vector<1024x256xbf16>
    %cst_11 = arith.constant dense<0.000000e+00> : vector<16x256xf32>
    %29 = tpu.matmul %27, %28, %cst_11 {dimension_numbers = #tpu.dot_dimension_numbers<[1], [0], [0], [1], [0, 0, 1, 1], [], []>} : vector<16x1024xbf16>, vector<1024x256xbf16>, vector<16x256xf32> -> vector<16x256xf32>
    %c0_12 = arith.constant 0 : index
    %c0_13 = arith.constant 0 : index
    %30 = vector.load %arg5[%c0_12, %c0_13] : memref<1x256xf32, #tpu.memory_space<vmem>>, vector<1x256xf32>
    %31 = vector.broadcast %30 : vector<1x256xf32> to vector<16x256xf32>
    %32 = arith.addf %29, %31 : vector<16x256xf32>
    %c0_14 = arith.constant 0 : index
    %c0_15 = arith.constant 0 : index
    %33 = vector.load %arg6[%c0_14, %c0_15] : memref<1x256xf32, #tpu.memory_space<vmem>>, vector<1x256xf32>
    %c0_16 = arith.constant 0 : index
    %c0_17 = arith.constant 0 : index
    %34 = vector.load %arg7[%c0_16, %c0_17] : memref<1x256xf32, #tpu.memory_space<vmem>>, vector<1x256xf32>
    %cst_18 = arith.constant dense<0.000000e+00> : vector<16xf32>
    %35 = vector.multi_reduction <add>, %32, %cst_18 [1] : vector<16x256xf32> to vector<16xf32>
    %36 = vector.shape_cast %35 : vector<16xf32> to vector<16x1xf32>
    %cst_19 = arith.constant 2.560000e+02 : f32
    %37 = vector.broadcast %cst_19 : f32 to vector<16x1xf32>
    %38 = arith.divf %36, %37 : vector<16x1xf32>
    %39 = vector.broadcast %38 : vector<16x1xf32> to vector<16x256xf32>
    %40 = arith.subf %32, %39 : vector<16x256xf32>
    %41 = vector.broadcast %38 : vector<16x1xf32> to vector<16x256xf32>
    %42 = arith.subf %32, %41 : vector<16x256xf32>
    %43 = arith.mulf %40, %42 : vector<16x256xf32>
    %cst_20 = arith.constant dense<0.000000e+00> : vector<16xf32>
    %44 = vector.multi_reduction <add>, %43, %cst_20 [1] : vector<16x256xf32> to vector<16xf32>
    %45 = vector.shape_cast %44 : vector<16xf32> to vector<16x1xf32>
    %cst_21 = arith.constant 2.560000e+02 : f32
    %46 = vector.broadcast %cst_21 : f32 to vector<16x1xf32>
    %47 = arith.divf %45, %46 : vector<16x1xf32>
    %48 = vector.broadcast %38 : vector<16x1xf32> to vector<16x256xf32>
    %49 = arith.subf %32, %48 : vector<16x256xf32>
    %cst_22 = arith.constant 9.99999974E-6 : f32
    %50 = vector.broadcast %cst_22 : f32 to vector<16x1xf32>
    %51 = arith.addf %47, %50 : vector<16x1xf32>
    %52 = math.rsqrt %51 : vector<16x1xf32>
    %53 = vector.broadcast %52 : vector<16x1xf32> to vector<16x256xf32>
    %54 = arith.mulf %49, %53 : vector<16x256xf32>
    %55 = vector.broadcast %33 : vector<1x256xf32> to vector<16x256xf32>
    %56 = arith.mulf %54, %55 : vector<16x256xf32>
    %57 = vector.broadcast %34 : vector<1x256xf32> to vector<16x256xf32>
    %58 = arith.addf %56, %57 : vector<16x256xf32>
    %59 = arith.truncf %58 : vector<16x256xf32> to vector<16x256xbf16>
    %c0_23 = arith.constant 0 : index
    %c0_24 = arith.constant 0 : index
    %60 = vector.load %arg8[%c0_23, %c0_24] : memref<256x128xbf16, #tpu.memory_space<vmem>>, vector<256x128xbf16>
    %cst_25 = arith.constant dense<0.000000e+00> : vector<16x128xf32>
    %61 = tpu.matmul %59, %60, %cst_25 {dimension_numbers = #tpu.dot_dimension_numbers<[1], [0], [0], [1], [0, 0, 1, 1], [], []>} : vector<16x256xbf16>, vector<256x128xbf16>, vector<16x128xf32> -> vector<16x128xf32>
    %c0_26 = arith.constant 0 : index
    %c0_27 = arith.constant 0 : index
    %62 = vector.load %arg9[%c0_26, %c0_27] : memref<1x128xf32, #tpu.memory_space<vmem>>, vector<1x128xf32>
    %63 = vector.broadcast %62 : vector<1x128xf32> to vector<16x128xf32>
    %64 = arith.addf %61, %63 : vector<16x128xf32>
    %cst_28 = arith.constant 0.000000e+00 : f32
    %65 = vector.broadcast %cst_28 : f32 to vector<16x128xf32>
    %66 = arith.maximumf %64, %65 : vector<16x128xf32>
    %67 = arith.truncf %66 : vector<16x128xf32> to vector<16x128xbf16>
    %c0_29 = arith.constant 0 : index
    %c0_30 = arith.constant 0 : index
    %68 = vector.load %arg10[%c0_29, %c0_30] : memref<128x128xbf16, #tpu.memory_space<vmem>>, vector<128x128xbf16>
    %cst_31 = arith.constant dense<0.000000e+00> : vector<16x128xf32>
    %69 = tpu.matmul %67, %68, %cst_31 {dimension_numbers = #tpu.dot_dimension_numbers<[1], [0], [0], [1], [0, 0, 1, 1], [], []>} : vector<16x128xbf16>, vector<128x128xbf16>, vector<16x128xf32> -> vector<16x128xf32>
    %c0_32 = arith.constant 0 : index
    %c0_33 = arith.constant 0 : index
    %70 = vector.load %arg11[%c0_32, %c0_33] : memref<1x128xf32, #tpu.memory_space<vmem>>, vector<1x128xf32>
    %71 = vector.broadcast %70 : vector<1x128xf32> to vector<16x128xf32>
    %72 = arith.addf %69, %71 : vector<16x128xf32>
    %c0_34 = arith.constant 0 : index
    %c0_35 = arith.constant 0 : index
    %73 = vector.load %arg12[%c0_34, %c0_35] : memref<16x128xf32, #tpu.memory_space<vmem>>, vector<16x128xf32>
    tpu.vector_store %arg12[%c0_34, %c0_35], %72 {strides = array<i32>} : memref<16x128xf32, #tpu.memory_space<vmem>>, vector<16x128xf32>,
    return
  }
  func.func @transform_0(%arg0: i32) -> (i32, i32) {
    %c0_i32 = arith.constant 0 : i32
    %c0_i32_0 = arith.constant 0 : i32
    return %arg0, %c0_i32 : i32, i32
  }
  func.func @transform_1(%arg0: i32) -> (i32, i32) {
    %c0_i32 = arith.constant 0 : i32
    %c0_i32_0 = arith.constant 0 : i32
    %c0_i32_1 = arith.constant 0 : i32
    return %c0_i32, %c0_i32_0 : i32, i32
  }
  func.func @transform_2(%arg0: i32) -> (i32, i32) {
    %c0_i32 = arith.constant 0 : i32
    %c0_i32_0 = arith.constant 0 : i32
    %c0_i32_1 = arith.constant 0 : i32
    return %c0_i32, %c0_i32_0 : i32, i32
  }
  func.func @transform_3(%arg0: i32) -> (i32, i32) {
    %c0_i32 = arith.constant 0 : i32
    %c0_i32_0 = arith.constant 0 : i32
    %c0_i32_1 = arith.constant 0 : i32
    return %c0_i32, %c0_i32_0 : i32, i32
  }
  func.func @transform_4(%arg0: i32) -> (i32, i32) {
    %c0_i32 = arith.constant 0 : i32
    %c0_i32_0 = arith.constant 0 : i32
    %c0_i32_1 = arith.constant 0 : i32
    return %c0_i32, %c0_i32_0 : i32, i32
  }
  func.func @transform_5(%arg0: i32) -> (i32, i32) {
    %c0_i32 = arith.constant 0 : i32
    %c0_i32_0 = arith.constant 0 : i32
    %c0_i32_1 = arith.constant 0 : i32
    return %c0_i32, %c0_i32_0 : i32, i32
  }
  func.func @transform_6(%arg0: i32) -> (i32, i32) {
    %c0_i32 = arith.constant 0 : i32
    %c0_i32_0 = arith.constant 0 : i32
    %c0_i32_1 = arith.constant 0 : i32
    return %c0_i32, %c0_i32_0 : i32, i32
  }
  func.func @transform_7(%arg0: i32) -> (i32, i32) {
    %c0_i32 = arith.constant 0 : i32
    %c0_i32_0 = arith.constant 0 : i32
    %c0_i32_1 = arith.constant 0 : i32
    return %c0_i32, %c0_i32_0 : i32, i32
  }
  func.func @transform_8(%arg0: i32) -> (i32, i32) {
    %c0_i32 = arith.constant 0 : i32
    %c0_i32_0 = arith.constant 0 : i32
    %c0_i32_1 = arith.constant 0 : i32
    return %c0_i32, %c0_i32_0 : i32, i32
  }
  func.func @transform_9(%arg0: i32) -> (i32, i32) {
    %c0_i32 = arith.constant 0 : i32
    %c0_i32_0 = arith.constant 0 : i32
    %c0_i32_1 = arith.constant 0 : i32
    return %c0_i32, %c0_i32_0 : i32, i32
  }
  func.func @transform_10(%arg0: i32) -> (i32, i32) {
    %c0_i32 = arith.constant 0 : i32
    %c0_i32_0 = arith.constant 0 : i32
    %c0_i32_1 = arith.constant 0 : i32
    return %c0_i32, %c0_i32_0 : i32, i32
  }
  func.func @transform_11(%arg0: i32) -> (i32, i32) {
    %c0_i32 = arith.constant 0 : i32
    %c0_i32_0 = arith.constant 0 : i32
    return %arg0, %c0_i32 : i32, i32
  }
}

</mosaic_0001>

<llo_original>
// kernel: tpu_custom_call.1
$region0: #{tpu_custom_call.1}
  #allocation0 [shape = 'u32[]', space=smem, size = 0x4, offset = 0x4, fixed_abs, tag = 'smem constant byte address 0x4 - core index']
  #allocation1 [shape = 'u32[144,128]{1,0:T(1,128)}', space=vmem, size = 0x12000, scoped, tag = 'internal scratch']
  %s0 = inlined_call_operand.hbm [shape: f32[16,1024], index: 0, kind: input, shape index: {}]
  %s1 = inlined_call_operand.hbm [shape: f32[1,1024], index: 1, kind: input, shape index: {}]
  %s2 = inlined_call_operand.hbm [shape: f32[1,1024], index: 2, kind: input, shape index: {}]
  %s3 = inlined_call_operand.hbm [shape: bf16[1024,256], index: 3, kind: input, shape index: {}]
  %s4 = inlined_call_operand.vmem [shape: f32[1,256], index: 4, kind: input, shape index: {}]
  %s5 = inlined_call_operand.vmem [shape: f32[1,256], index: 5, kind: input, shape index: {}]
  %s6 = inlined_call_operand.vmem [shape: f32[1,256], index: 6, kind: input, shape index: {}]
  %s7 = inlined_call_operand.hbm [shape: bf16[256,128], index: 7, kind: input, shape index: {}]
  %s8 = inlined_call_operand.vmem [shape: f32[1,128], index: 8, kind: input, shape index: {}]
  %s9 = inlined_call_operand.hbm [shape: bf16[128,128], index: 9, kind: input, shape index: {}]
  %s10 = inlined_call_operand.vmem [shape: f32[1,128], index: 10, kind: input, shape index: {}]
  %s11 = inlined_call_operand.hbm [shape: f32[16,128], index: 11, kind: output, shape index: {}]
  %s12 = sld [smem:[#allocation0]]
  $region78: #{tpu_custom_call.1} parent=0
    _
  %s14 = ssub.s32 1, %s12
  %s15 = scalar_select 0, %s14, %s12
  $region1: #{tpu_custom_call.1} parent=0
    #allocation2 [shape = 'u8[65536]{0}', space=vmem, size = 0x10000, scoped, tag = 'input window, operand 0, single buffered']
    #allocation3 [shape = 's32[1]{0}', space=sflag, size = 0x4, scoped, tag = 'scoped memory for tpu_custom_call.1']
    #allocation4 [shape = 's32[1]{0}', space=sflag, size = 0x4, scoped, tag = 'scoped memory for tpu_custom_call.1']
    #allocation5 [shape = 'u8[4096]{0}', space=vmem, size = 0x1000, scoped, tag = 'input window, operand 1, single buffered']
    #allocation6 [shape = 's32[1]{0}', space=sflag, size = 0x4, scoped, tag = 'scoped memory for tpu_custom_call.1']
    #allocation7 [shape = 'u8[4096]{0}', space=vmem, size = 0x1000, scoped, tag = 'input window, operand 2, single buffered']
    #allocation8 [shape = 'u8[524288]{0}', space=vmem, size = 0x80000, scoped, tag = 'input window, operand 3, single buffered']
    #allocation9 [shape = 's32[1]{0}', space=sflag, size = 0x4, scoped, tag = 'scoped memory for tpu_custom_call.1']
    #allocation10 [shape = 'u8[65536]{0}', space=vmem, size = 0x10000, scoped, tag = 'input window, operand 7, single buffered']
    #allocation11 [shape = 'u8[32768]{0}', space=vmem, size = 0x8000, scoped, tag = 'input window, operand 9, single buffered']
    #allocation12 [shape = 's32[1]{0}', space=sflag, size = 0x4, scoped, tag = 'scoped memory for tpu_custom_call.1']
    #allocation13 [shape = 'u8[8192]{0}', space=vmem, size = 0x2000, scoped, tag = 'output window, operand 0, single buffered']
    %16 = vsyncpa [#allocation3], 0
    %17 = vsyncpa [#allocation6], 0
    %18 = vsyncpa [#allocation9], 0
    %19 = vsyncpa [#allocation12], 0
    %20 = vsyncpa [#allocation4], 0
    // Predicated region
    $region2: #{tpu_custom_call.1} parent=1 // pred_check
      _
    $region3: #{tpu_custom_call.1} parent=1 // pred_check_branch
      %22 = sbr.rel (0) target = $region5
    $region4: #{tpu_custom_call.1} parent=1 // pred_region
      %s24 = ssub.s32 2048, 2048
      %25 = vsyncadd [#allocation3], %s24
      %s26 = sshll.u32 [#allocation2], 4
      %s27 = int_to_ptr.vmem [resolvable:$true] %s26
      %32 = dma.hbm_to_vmem [thread:$0]  %s0, 2048, %s27, [#allocation3], 1024, 1024, 64
    $region5: #{tpu_custom_call.1} parent=1 // pred_fallthru
      _
    // Predicated region
    $region6: #{tpu_custom_call.1} parent=1 // pred_check
      _
    $region7: #{tpu_custom_call.1} parent=1 // pred_check_branch
      %34 = sbr.rel (0) target = $region9
    $region8: #{tpu_custom_call.1} parent=1 // pred_region
      %s36 = ssub.s32 128, 128
      %37 = vsyncadd [#allocation6], %s36
      %s39 = sshll.u32 [#allocation5], 4
      %s40 = int_to_ptr.vmem [resolvable:$true] %s39
      %42 = dma.hbm_to_vmem [thread:$0]  %s1, 128, %s40, [#allocation6]
    $region9: #{tpu_custom_call.1} parent=1 // pred_fallthru
      _
    // Predicated region
    $region10: #{tpu_custom_call.1} parent=1 // pred_check
      _
    $region11: #{tpu_custom_call.1} parent=1 // pred_check_branch
      %44 = sbr.rel (0) target = $region13
    $region12: #{tpu_custom_call.1} parent=1 // pred_region
      %s46 = ssub.s32 128, 128
      %47 = vsyncadd [#allocation6], %s46
      %s49 = sshll.u32 [#allocation7], 4
      %s50 = int_to_ptr.vmem [resolvable:$true] %s49
      %52 = dma.hbm_to_vmem [thread:$0]  %s2, 128, %s50, [#allocation6]
    $region13: #{tpu_custom_call.1} parent=1 // pred_fallthru
      _
    // Predicated region
    $region14: #{tpu_custom_call.1} parent=1 // pred_check
      _
    $region15: #{tpu_custom_call.1} parent=1 // pred_check_branch
      %54 = sbr.rel (0) target = $region17
    $region16: #{tpu_custom_call.1} parent=1 // pred_region
      %s56 = ssub.s32 16384, 16384
      %57 = vsyncadd [#allocation9], %s56
      %s58 = sshll.u32 [#allocation8], 4
      %s59 = int_to_ptr.vmem [resolvable:$true] %s58
      %64 = dma.hbm_to_vmem [thread:$0]  %s3, 16384, %s59, [#allocation9], 128, 128, 8
    $region17: #{tpu_custom_call.1} parent=1 // pred_fallthru
      _
    // Predicated region
    $region18: #{tpu_custom_call.1} parent=1 // pred_check
      _
    $region19: #{tpu_custom_call.1} parent=1 // pred_check_branch
      %66 = sbr.rel (0) target = $region21
    $region20: #{tpu_custom_call.1} parent=1 // pred_region
      _
    $region21: #{tpu_custom_call.1} parent=1 // pred_fallthru
      _
    // Predicated region
    $region22: #{tpu_custom_call.1} parent=1 // pred_check
      _
    $region23: #{tpu_custom_call.1} parent=1 // pred_check_branch
      %68 = sbr.rel (0) target = $region25
    $region24: #{tpu_custom_call.1} parent=1 // pred_region
      _
    $region25: #{tpu_custom_call.1} parent=1 // pred_fallthru
      _
    // Predicated region
    $region26: #{tpu_custom_call.1} parent=1 // pred_check
      _
    $region27: #{tpu_custom_call.1} parent=1 // pred_check_branch
      %70 = sbr.rel (0) target = $region29
    $region28: #{tpu_custom_call.1} parent=1 // pred_region
      _
    $region29: #{tpu_custom_call.1} parent=1 // pred_fallthru
      _
    // Predicated region
    $region30: #{tpu_custom_call.1} parent=1 // pred_check
      _
    $region31: #{tpu_custom_call.1} parent=1 // pred_check_branch
      %72 = sbr.rel (0) target = $region33
    $region32: #{tpu_custom_call.1} parent=1 // pred_region
      %s74 = ssub.s32 2048, 2048
      %75 = vsyncadd [#allocation9], %s74
      %s76 = sshll.u32 [#allocation10], 4
      %s77 = int_to_ptr.vmem [resolvable:$true] %s76
      %82 = dma.hbm_to_vmem [thread:$0]  %s7, 2048, %s77, [#allocation9], 64, 64, 4
    $region33: #{tpu_custom_call.1} parent=1 // pred_fallthru
      _
    // Predicated region
    $region34: #{tpu_custom_call.1} parent=1 // pred_check
      _
    $region35: #{tpu_custom_call.1} parent=1 // pred_check_branch
      %84 = sbr.rel (0) target = $region37
    $region36: #{tpu_custom_call.1} parent=1 // pred_region
      _
    $region37: #{tpu_custom_call.1} parent=1 // pred_fallthru
      _
    // Predicated region
    $region38: #{tpu_custom_call.1} parent=1 // pred_check
      _
    $region39: #{tpu_custom_call.1} parent=1 // pred_check_branch
      %86 = sbr.rel (0) target = $region41
    $region40: #{tpu_custom_call.1} parent=1 // pred_region
      %s88 = ssub.s32 1024, 1024
      %89 = vsyncadd [#allocation12], %s88
      %s90 = sshll.u32 [#allocation11], 4
      %s91 = int_to_ptr.vmem [resolvable:$true] %s90
      %96 = dma.hbm_to_vmem [thread:$0]  %s9, 1024, %s91, [#allocation12], 64, 64, 4
    $region41: #{tpu_custom_call.1} parent=1 // pred_fallthru
      _
    // Predicated region
    $region42: #{tpu_custom_call.1} parent=1 // pred_check
      _
    $region43: #{tpu_custom_call.1} parent=1 // pred_check_branch
      %98 = sbr.rel (0) target = $region45
    $region44: #{tpu_custom_call.1} parent=1 // pred_region
      _
    $region45: #{tpu_custom_call.1} parent=1 // pred_fallthru
      _
    // Predicated region
    $region46: #{tpu_custom_call.1} parent=1 // pred_check
      _
    $region47: #{tpu_custom_call.1} parent=1 // pred_check_branch
      %100 = sbr.rel (0) target = $region49
    $region48: #{tpu_custom_call.1} parent=1 // pred_region
      %101 = dma.done [#allocation3], 2048
    $region49: #{tpu_custom_call.1} parent=1 // pred_fallthru
      _
    // Predicated region
    $region50: #{tpu_custom_call.1} parent=1 // pred_check
      _
    $region51: #{tpu_custom_call.1} parent=1 // pred_check_branch
      %103 = sbr.rel (0) target = $region53
    $region52: #{tpu_custom_call.1} parent=1 // pred_region
      %104 = dma.done [#allocation6], 128
    $region53: #{tpu_custom_call.1} parent=1 // pred_fallthru
      _
    // Predicated region
    $region54: #{tpu_custom_call.1} parent=1 // pred_check
      _
    $region55: #{tpu_custom_call.1} parent=1 // pred_check_branch
      %106 = sbr.rel (0) target = $region57
    $region56: #{tpu_custom_call.1} parent=1 // pred_region
      %107 = dma.done [#allocation6], 128
    $region57: #{tpu_custom_call.1} parent=1 // pred_fallthru
      _
    // Predicated region
    $region58: #{tpu_custom_call.1} parent=1 // pred_check
      _
    $region59: #{tpu_custom_call.1} parent=1 // pred_check_branch
      %109 = sbr.rel (0) target = $region61
    $region60: #{tpu_custom_call.1} parent=1 // pred_region
      %110 = dma.done [#allocation9], 16384
    $region61: #{tpu_custom_call.1} parent=1 // pred_fallthru
      _
    // Predicated region
    $region62: #{tpu_custom_call.1} parent=1 // pred_check
      _
    $region63: #{tpu_custom_call.1} parent=1 // pred_check_branch
      %112 = sbr.rel (0) target = $region65
    $region64: #{tpu_custom_call.1} parent=1 // pred_region
      %113 = dma.done [#allocation9], 2048
    $region65: #{tpu_custom_call.1} parent=1 // pred_fallthru
      _
    // Predicated region
    $region66: #{tpu_custom_call.1} parent=1 // pred_check
      _
    $region67: #{tpu_custom_call.1} parent=1 // pred_check_branch
      %115 = sbr.rel (0) target = $region69
    $region68: #{tpu_custom_call.1} parent=1 // pred_region
      %116 = dma.done [#allocation12], 1024
    $region69: #{tpu_custom_call.1} parent=1 // pred_fallthru
      _
    %v118 = vld [vmem:[#allocation2] sm:$0xff]
    %v119 = vld [vmem:[#allocation2 + $0x8] sm:$0xff]
    %v120 = vld [vmem:[#allocation2 + $0x10] sm:$0xff]
    %v121 = vld [vmem:[#allocation2 + $0x18] sm:$0xff]
    %v122 = vld [vmem:[#allocation2 + $0x20] sm:$0xff]
    %v123 = vld [vmem:[#allocation2 + $0x28] sm:$0xff]
    %v124 = vld [vmem:[#allocation2 + $0x30] sm:$0xff]
    %v125 = vld [vmem:[#allocation2 + $0x38] sm:$0xff]
    %v126 = vld [vmem:[#allocation2 + $0x40] sm:$0xff]
    %v127 = vld [vmem:[#allocation2 + $0x48] sm:$0xff]
    %v128 = vld [vmem:[#allocation2 + $0x50] sm:$0xff]
    %v129 = vld [vmem:[#allocation2 + $0x58] sm:$0xff]
    %v130 = vld [vmem:[#allocation2 + $0x60] sm:$0xff]
    %v131 = vld [vmem:[#allocation2 + $0x68] sm:$0xff]
    %v132 = vld [vmem:[#allocation2 + $0x70] sm:$0xff]
    %v133 = vld [vmem:[#allocation2 + $0x78] sm:$0xff]
    %v134 = vld [vmem:[#allocation5] sm:$0xff]
    %v135 = vld [vmem:[#allocation7] sm:$0xff]
    %v136 = vadd.f32 %v118, %v119
    %v137 = vadd.f32 %v136, %v120
    %v138 = vadd.f32 %v137, %v121
    %v139 = vadd.f32 %v138, %v122
    %v140 = vadd.f32 %v139, %v123
    %v141 = vadd.f32 %v140, %v124
    %v142 = vadd.f32 %v141, %v125
    %143 = vadd.xlane.f32.xlu0 %v142
    %v144 = vpop.xlane.xlu0 %143
    %v145 = vadd.f32 %v126, %v127
    %v146 = vadd.f32 %v145, %v128
    %v147 = vadd.f32 %v146, %v129
    %v148 = vadd.f32 %v147, %v130
    %v149 = vadd.f32 %v148, %v131
    %v150 = vadd.f32 %v149, %v132
    %v151 = vadd.f32 %v150, %v133
    %152 = vadd.xlane.f32.xlu0 %v151
    %v153 = vpop.xlane.xlu0 %152
    %v154 = vrcp.pop 1024.0
    %v155 = vmul.f32 %v144, %v154
    %v156 = vmul.f32 %v153, %v154
    %v157 = vsub.f32 %v118, %v155
    %v158 = vsub.f32 %v119, %v155
    %v159 = vsub.f32 %v120, %v155
    %v160 = vsub.f32 %v121, %v155
    %v161 = vsub.f32 %v122, %v155
    %v162 = vsub.f32 %v123, %v155
    %v163 = vsub.f32 %v124, %v155
    %v164 = vsub.f32 %v125, %v155
    %v165 = vsub.f32 %v126, %v156
    %v166 = vsub.f32 %v127, %v156
    %v167 = vsub.f32 %v128, %v156
    %v168 = vsub.f32 %v129, %v156
    %v169 = vsub.f32 %v130, %v156
    %v170 = vsub.f32 %v131, %v156
    %v171 = vsub.f32 %v132, %v156
    %v172 = vsub.f32 %v133, %v156
    %v173 = vmul.f32 %v157, %v157
    %v174 = vmul.f32 %v158, %v158
    %v175 = vmul.f32 %v159, %v159
    %v176 = vmul.f32 %v160, %v160
    %v177 = vmul.f32 %v161, %v161
    %v178 = vmul.f32 %v162, %v162
    %v179 = vmul.f32 %v163, %v163
    %v180 = vmul.f32 %v164, %v164
    %v181 = vmul.f32 %v165, %v165
    %v182 = vmul.f32 %v166, %v166
    %v183 = vmul.f32 %v167, %v167
    %v184 = vmul.f32 %v168, %v168
    %v185 = vmul.f32 %v169, %v169
    %v186 = vmul.f32 %v170, %v170
    %v187 = vmul.f32 %v171, %v171
    %v188 = vmul.f32 %v172, %v172
    %v189 = vadd.f32 %v173, %v174
    %v190 = vadd.f32 %v189, %v175
    %v191 = vadd.f32 %v190, %v176
    %v192 = vadd.f32 %v191, %v177
    %v193 = vadd.f32 %v192, %v178
    %v194 = vadd.f32 %v193, %v179
    %v195 = vadd.f32 %v194, %v180
    %196 = vadd.xlane.f32.xlu0 %v195
    %v197 = vpop.xlane.xlu0 %196
    %v198 = vadd.f32 %v181, %v182
    %v199 = vadd.f32 %v198, %v183
    %v200 = vadd.f32 %v199, %v184
    %v201 = vadd.f32 %v200, %v185
    %v202 = vadd.f32 %v201, %v186
    %v203 = vadd.f32 %v202, %v187
    %v204 = vadd.f32 %v203, %v188
    %205 = vadd.xlane.f32.xlu0 %v204
    %v206 = vpop.xlane.xlu0 %205
    %v207 = vmul.f32 %v197, %v154
    %v208 = vmul.f32 %v206, %v154
    %v209 = vadd.f32 %v207, 1e-06
    %v210 = vadd.f32 %v208, 1e-06
    %v211 = vrsqrt.pop %v209
    %v212 = vrsqrt.pop %v210
    %v213 = vmul.f32 %v157, %v211
    %v214 = vmul.f32 %v158, %v211
    %v215 = vmul.f32 %v159, %v211
    %v216 = vmul.f32 %v160, %v211
    %v217 = vmul.f32 %v161, %v211
    %v218 = vmul.f32 %v162, %v211
    %v219 = vmul.f32 %v163, %v211
    %v220 = vmul.f32 %v164, %v211
    %v221 = vmul.f32 %v165, %v212
    %v222 = vmul.f32 %v166, %v212
    %v223 = vmul.f32 %v167, %v212
    %v224 = vmul.f32 %v168, %v212
    %v225 = vmul.f32 %v169, %v212
    %v226 = vmul.f32 %v170, %v212
    %v227 = vmul.f32 %v171, %v212
    %v228 = vmul.f32 %v172, %v212
    %v230 = vlaneseq
    %v231 = vshrl.u32 %v230, 7
    %v232 = vsub.s32 0, %v231
    %v233 = vrot.slane %v134, %v232
    %v234 = vlaneseq
    %v235 = vshrl.u32 %v234, 7
    %v236 = vsub.s32 1, %v235
    %v237 = vrot.slane %v134, %v236
    %v238 = vlaneseq
    %v239 = vshrl.u32 %v238, 7
    %v240 = vsub.s32 2, %v239
    %v241 = vrot.slane %v134, %v240
    %v242 = vlaneseq
    %v243 = vshrl.u32 %v242, 7
    %v244 = vsub.s32 3, %v243
    %v245 = vrot.slane %v134, %v244
    %v246 = vlaneseq
    %v247 = vshrl.u32 %v246, 7
    %v248 = vsub.s32 4, %v247
    %v249 = vrot.slane %v134, %v248
    %v250 = vlaneseq
    %v251 = vshrl.u32 %v250, 7
    %v252 = vsub.s32 5, %v251
    %v253 = vrot.slane %v134, %v252
    %v254 = vlaneseq
    %v255 = vshrl.u32 %v254, 7
    %v256 = vsub.s32 6, %v255
    %v257 = vrot.slane %v134, %v256
    %v258 = vlaneseq
    %v259 = vshrl.u32 %v258, 7
    %v260 = vsub.s32 7, %v259
    %v261 = vrot.slane %v134, %v260
    %v270 = vmul.f32 %v213, %v233
    %v271 = vmul.f32 %v214, %v237
    %v272 = vmul.f32 %v215, %v241
    %v273 = vmul.f32 %v216, %v245
    %v274 = vmul.f32 %v217, %v249
    %v275 = vmul.f32 %v218, %v253
    %v276 = vmul.f32 %v219, %v257
    %v277 = vmul.f32 %v220, %v261
    %v278 = vmul.f32 %v221, %v233
    %v279 = vmul.f32 %v222, %v237
    %v280 = vmul.f32 %v223, %v241
    %v281 = vmul.f32 %v224, %v245
    %v282 = vmul.f32 %v225, %v249
    %v283 = vmul.f32 %v226, %v253
    %v284 = vmul.f32 %v227, %v257
    %v285 = vmul.f32 %v228, %v261
    %v287 = vlaneseq
    %v288 = vshrl.u32 %v287, 7
    %v289 = vsub.s32 0, %v288
    %v290 = vrot.slane %v135, %v289
    %v291 = vlaneseq
    %v292 = vshrl.u32 %v291, 7
    %v293 = vsub.s32 1, %v292
    %v294 = vrot.slane %v135, %v293
    %v295 = vlaneseq
    %v296 = vshrl.u32 %v295, 7
    %v297 = vsub.s32 2, %v296
    %v298 = vrot.slane %v135, %v297
    %v299 = vlaneseq
    %v300 = vshrl.u32 %v299, 7
    %v301 = vsub.s32 3, %v300
    %v302 = vrot.slane %v135, %v301
    %v303 = vlaneseq
    %v304 = vshrl.u32 %v303, 7
    %v305 = vsub.s32 4, %v304
    %v306 = vrot.slane %v135, %v305
    %v307 = vlaneseq
    %v308 = vshrl.u32 %v307, 7
    %v309 = vsub.s32 5, %v308
    %v310 = vrot.slane %v135, %v309
    %v311 = vlaneseq
    %v312 = vshrl.u32 %v311, 7
    %v313 = vsub.s32 6, %v312
    %v314 = vrot.slane %v135, %v313
    %v315 = vlaneseq
    %v316 = vshrl.u32 %v315, 7
    %v317 = vsub.s32 7, %v316
    %v318 = vrot.slane %v135, %v317
    %v327 = vadd.f32 %v270, %v290
    %v328 = vadd.f32 %v271, %v294
    %v329 = vadd.f32 %v272, %v298
    %v330 = vadd.f32 %v273, %v302
    %v331 = vadd.f32 %v274, %v306
    %v332 = vadd.f32 %v275, %v310
    %v333 = vadd.f32 %v276, %v314
    %v334 = vadd.f32 %v277, %v318
    %v335 = vadd.f32 %v278, %v290
    %v336 = vadd.f32 %v279, %v294
    %v337 = vadd.f32 %v280, %v298
    %v338 = vadd.f32 %v281, %v302
    %v339 = vadd.f32 %v282, %v306
    %v340 = vadd.f32 %v283, %v310
    %v341 = vadd.f32 %v284, %v314
    %v342 = vadd.f32 %v285, %v318
    %v343 = vpack.c.bf16 %v335, %v327
    %v344 = vpack.c.bf16 %v336, %v328
    %v345 = vpack.c.bf16 %v337, %v329
    %v346 = vpack.c.bf16 %v338, %v330
    %v347 = vpack.c.bf16 %v339, %v331
    %v348 = vpack.c.bf16 %v340, %v332
    %v349 = vpack.c.bf16 %v341, %v333
    %v350 = vpack.c.bf16 %v342, %v334
    %v351 = vld [vmem:[#allocation8] sm:$0xff]
    %v352 = vld [vmem:[#allocation8 + $0x8] sm:$0xff]
    %v353 = vld [vmem:[#allocation8 + $0x10] sm:$0xff]
    %v354 = vld [vmem:[#allocation8 + $0x18] sm:$0xff]
    %v355 = vld [vmem:[#allocation8 + $0x20] sm:$0xff]
    %v356 = vld [vmem:[#allocation8 + $0x28] sm:$0xff]
    %v357 = vld [vmem:[#allocation8 + $0x30] sm:$0xff]
    %v358 = vld [vmem:[#allocation8 + $0x38] sm:$0xff]
    %v359 = vld [vmem:[#allocation8 + $0x40] sm:$0xff]
    %v360 = vld [vmem:[#allocation8 + $0x48] sm:$0xff]
    %v361 = vld [vmem:[#allocation8 + $0x50] sm:$0xff]
    %v362 = vld [vmem:[#allocation8 + $0x58] sm:$0xff]
    %v363 = vld [vmem:[#allocation8 + $0x60] sm:$0xff]
    %v364 = vld [vmem:[#allocation8 + $0x68] sm:$0xff]
    %v365 = vld [vmem:[#allocation8 + $0x70] sm:$0xff]
    %v366 = vld [vmem:[#allocation8 + $0x78] sm:$0xff]
    %v367 = vld [vmem:[#allocation8 + $0x80] sm:$0xff]
    %v368 = vld [vmem:[#allocation8 + $0x88] sm:$0xff]
    %v369 = vld [vmem:[#allocation8 + $0x90] sm:$0xff]
    %v370 = vld [vmem:[#allocation8 + $0x98] sm:$0xff]
    %v371 = vld [vmem:[#allocation8 + $0xa0] sm:$0xff]
    %v372 = vld [vmem:[#allocation8 + $0xa8] sm:$0xff]
    %v373 = vld [vmem:[#allocation8 + $0xb0] sm:$0xff]
    %v374 = vld [vmem:[#allocation8 + $0xb8] sm:$0xff]
    %v375 = vld [vmem:[#allocation8 + $0xc0] sm:$0xff]
    %v376 = vld [vmem:[#allocation8 + $0xc8] sm:$0xff]
    %v377 = vld [vmem:[#allocation8 + $0xd0] sm:$0xff]
    %v378 = vld [vmem:[#allocation8 + $0xd8] sm:$0xff]
    %v379 = vld [vmem:[#allocation8 + $0xe0] sm:$0xff]
    %v380 = vld [vmem:[#allocation8 + $0xe8] sm:$0xff]
    %v381 = vld [vmem:[#allocation8 + $0xf0] sm:$0xff]
    %v382 = vld [vmem:[#allocation8 + $0xf8] sm:$0xff]
    %v383 = vld [vmem:[#allocation8 + $0x100] sm:$0xff]
    %v384 = vld [vmem:[#allocation8 + $0x108] sm:$0xff]
    %v385 = vld [vmem:[#allocation8 + $0x110] sm:$0xff]
    %v386 = vld [vmem:[#allocation8 + $0x118] sm:$0xff]
    %v387 = vld [vmem:[#allocation8 + $0x120] sm:$0xff]
    %v388 = vld [vmem:[#allocation8 + $0x128] sm:$0xff]
    %v389 = vld [vmem:[#allocation8 + $0x130] sm:$0xff]
    %v390 = vld [vmem:[#allocation8 + $0x138] sm:$0xff]
    %v391 = vld [vmem:[#allocation8 + $0x140] sm:$0xff]
    %v392 = vld [vmem:[#allocation8 + $0x148] sm:$0xff]
    %v393 = vld [vmem:[#allocation8 + $0x150] sm:$0xff]
    %v394 = vld [vmem:[#allocation8 + $0x158] sm:$0xff]
    %v395 = vld [vmem:[#allocation8 + $0x160] sm:$0xff]
    %v396 = vld [vmem:[#allocation8 + $0x168] sm:$0xff]
    %v397 = vld [vmem:[#allocation8 + $0x170] sm:$0xff]
    %v398 = vld [vmem:[#allocation8 + $0x178] sm:$0xff]
    %v399 = vld [vmem:[#allocation8 + $0x180] sm:$0xff]
    %v400 = vld [vmem:[#allocation8 + $0x188] sm:$0xff]
    %v401 = vld [vmem:[#allocation8 + $0x190] sm:$0xff]
    %v402 = vld [vmem:[#allocation8 + $0x198] sm:$0xff]
    %v403 = vld [vmem:[#allocation8 + $0x1a0] sm:$0xff]
    %v404 = vld [vmem:[#allocation8 + $0x1a8] sm:$0xff]
    %v405 = vld [vmem:[#allocation8 + $0x1b0] sm:$0xff]
    %v406 = vld [vmem:[#allocation8 + $0x1b8] sm:$0xff]
    %v407 = vld [vmem:[#allocation8 + $0x1c0] sm:$0xff]
    %v408 = vld [vmem:[#allocation8 + $0x1c8] sm:$0xff]
    %v409 = vld [vmem:[#allocation8 + $0x1d0] sm:$0xff]
    %v410 = vld [vmem:[#allocation8 + $0x1d8] sm:$0xff]
    %v411 = vld [vmem:[#allocation8 + $0x1e0] sm:$0xff]
    %v412 = vld [vmem:[#allocation8 + $0x1e8] sm:$0xff]
    %v413 = vld [vmem:[#allocation8 + $0x1f0] sm:$0xff]
    %v414 = vld [vmem:[#allocation8 + $0x1f8] sm:$0xff]
    %v415 = vld [vmem:[#allocation8 + $0x200] sm:$0xff]
    %v416 = vld [vmem:[#allocation8 + $0x208] sm:$0xff]
    %v417 = vld [vmem:[#allocation8 + $0x210] sm:$0xff]
    %v418 = vld [vmem:[#allocation8 + $0x218] sm:$0xff]
    %v419 = vld [vmem:[#allocation8 + $0x220] sm:$0xff]
    %v420 = vld [vmem:[#allocation8 + $0x228] sm:$0xff]
    %v421 = vld [vmem:[#allocation8 + $0x230] sm:$0xff]
    %v422 = vld [vmem:[#allocation8 + $0x238] sm:$0xff]
    %v423 = vld [vmem:[#allocation8 + $0x240] sm:$0xff]
    %v424 = vld [vmem:[#allocation8 + $0x248] sm:$0xff]
    %v425 = vld [vmem:[#allocation8 + $0x250] sm:$0xff]
    %v426 = vld [vmem:[#allocation8 + $0x258] sm:$0xff]
    %v427 = vld [vmem:[#allocation8 + $0x260] sm:$0xff]
    %v428 = vld [vmem:[#allocation8 + $0x268] sm:$0xff]
    %v429 = vld [vmem:[#allocation8 + $0x270] sm:$0xff]
    %v430 = vld [vmem:[#allocation8 + $0x278] sm:$0xff]
    %v431 = vld [vmem:[#allocation8 + $0x280] sm:$0xff]
    %v432 = vld [vmem:[#allocation8 + $0x288] sm:$0xff]
    %v433 = vld [vmem:[#allocation8 + $0x290] sm:$0xff]
    %v434 = vld [vmem:[#allocation8 + $0x298] sm:$0xff]
    %v435 = vld [vmem:[#allocation8 + $0x2a0] sm:$0xff]
    %v436 = vld [vmem:[#allocation8 + $0x2a8] sm:$0xff]
    %v437 = vld [vmem:[#allocation8 + $0x2b0] sm:$0xff]
    %v438 = vld [vmem:[#allocation8 + $0x2b8] sm:$0xff]
    %v439 = vld [vmem:[#allocation8 + $0x2c0] sm:$0xff]
    %v440 = vld [vmem:[#allocation8 + $0x2c8] sm:$0xff]
    %v441 = vld [vmem:[#allocation8 + $0x2d0] sm:$0xff]
    %v442 = vld [vmem:[#allocation8 + $0x2d8] sm:$0xff]
    %v443 = vld [vmem:[#allocation8 + $0x2e0] sm:$0xff]
    %v444 = vld [vmem:[#allocation8 + $0x2e8] sm:$0xff]
    %v445 = vld [vmem:[#allocation8 + $0x2f0] sm:$0xff]
    %v446 = vld [vmem:[#allocation8 + $0x2f8] sm:$0xff]
    %v447 = vld [vmem:[#allocation8 + $0x300] sm:$0xff]
    %v448 = vld [vmem:[#allocation8 + $0x308] sm:$0xff]
    %v449 = vld [vmem:[#allocation8 + $0x310] sm:$0xff]
    %v450 = vld [vmem:[#allocation8 + $0x318] sm:$0xff]
    %v451 = vld [vmem:[#allocation8 + $0x320] sm:$0xff]
    %v452 = vld [vmem:[#allocation8 + $0x328] sm:$0xff]
    %v453 = vld [vmem:[#allocation8 + $0x330] sm:$0xff]
    %v454 = vld [vmem:[#allocation8 + $0x338] sm:$0xff]
    %v455 = vld [vmem:[#allocation8 + $0x340] sm:$0xff]
    %v456 = vld [vmem:[#allocation8 + $0x348] sm:$0xff]
    %v457 = vld [vmem:[#allocation8 + $0x350] sm:$0xff]
    %v458 = vld [vmem:[#allocation8 + $0x358] sm:$0xff]
    %v459 = vld [vmem:[#allocation8 + $0x360] sm:$0xff]
    %v460 = vld [vmem:[#allocation8 + $0x368] sm:$0xff]
    %v461 = vld [vmem:[#allocation8 + $0x370] sm:$0xff]
    %v462 = vld [vmem:[#allocation8 + $0x378] sm:$0xff]
    %v463 = vld [vmem:[#allocation8 + $0x380] sm:$0xff]
    %v464 = vld [vmem:[#allocation8 + $0x388] sm:$0xff]
    %v465 = vld [vmem:[#allocation8 + $0x390] sm:$0xff]
    %v466 = vld [vmem:[#allocation8 + $0x398] sm:$0xff]
    %v467 = vld [vmem:[#allocation8 + $0x3a0] sm:$0xff]
    %v468 = vld [vmem:[#allocation8 + $0x3a8] sm:$0xff]
    %v469 = vld [vmem:[#allocation8 + $0x3b0] sm:$0xff]
    %v470 = vld [vmem:[#allocation8 + $0x3b8] sm:$0xff]
    %v471 = vld [vmem:[#allocation8 + $0x3c0] sm:$0xff]
    %v472 = vld [vmem:[#allocation8 + $0x3c8] sm:$0xff]
    %v473 = vld [vmem:[#allocation8 + $0x3d0] sm:$0xff]
    %v474 = vld [vmem:[#allocation8 + $0x3d8] sm:$0xff]
    %v475 = vld [vmem:[#allocation8 + $0x3e0] sm:$0xff]
    %v476 = vld [vmem:[#allocation8 + $0x3e8] sm:$0xff]
    %v477 = vld [vmem:[#allocation8 + $0x3f0] sm:$0xff]
    %v478 = vld [vmem:[#allocation8 + $0x3f8] sm:$0xff]
    %v479 = vld [vmem:[%s4] sm:$0x3]
    %v481 = vlaneseq
    %v482 = vshrl.u32 %v481, 7
    %v483 = vsub.s32 0, %v482
    %v484 = vrot.slane %v479, %v483
    %v485 = vlaneseq
    %v486 = vshrl.u32 %v485, 7
    %v487 = vsub.s32 1, %v486
    %v488 = vrot.slane %v479, %v487
    %v619 = vunpack.c.l.b16 %v351
    %v620 = vunpack.c.h.b16 %v351
    %v621 = vunpack.c.l.b16 %v352
    %v622 = vunpack.c.h.b16 %v352
    %v623 = vunpack.c.l.b16 %v353
    %v624 = vunpack.c.h.b16 %v353
    %v625 = vunpack.c.l.b16 %v354
    %v626 = vunpack.c.h.b16 %v354
    %v627 = vunpack.c.l.b16 %v355
    %v628 = vunpack.c.h.b16 %v355
    %v629 = vunpack.c.l.b16 %v356
    %v630 = vunpack.c.h.b16 %v356
    %v631 = vunpack.c.l.b16 %v357
    %v632 = vunpack.c.h.b16 %v357
    %v633 = vunpack.c.l.b16 %v358
    %v634 = vunpack.c.h.b16 %v358
    %v635 = vunpack.c.l.b16 %v359
    %v636 = vunpack.c.h.b16 %v359
    %v637 = vunpack.c.l.b16 %v360
    %v638 = vunpack.c.h.b16 %v360
    %v639 = vunpack.c.l.b16 %v361
    %v640 = vunpack.c.h.b16 %v361
    %v641 = vunpack.c.l.b16 %v362
    %v642 = vunpack.c.h.b16 %v362
    %v643 = vunpack.c.l.b16 %v363
    %v644 = vunpack.c.h.b16 %v363
    %v645 = vunpack.c.l.b16 %v364
    %v646 = vunpack.c.h.b16 %v364
    %v647 = vunpack.c.l.b16 %v365
    %v648 = vunpack.c.h.b16 %v365
    %v649 = vunpack.c.l.b16 %v366
    %v650 = vunpack.c.h.b16 %v366
    %v651 = vunpack.c.l.b16 %v367
    %v652 = vunpack.c.h.b16 %v367
    %v653 = vunpack.c.l.b16 %v368
    %v654 = vunpack.c.h.b16 %v368
    %v655 = vunpack.c.l.b16 %v369
    %v656 = vunpack.c.h.b16 %v369
    %v657 = vunpack.c.l.b16 %v370
    %v658 = vunpack.c.h.b16 %v370
    %v659 = vunpack.c.l.b16 %v371
    %v660 = vunpack.c.h.b16 %v371
    %v661 = vunpack.c.l.b16 %v372
    %v662 = vunpack.c.h.b16 %v372
    %v663 = vunpack.c.l.b16 %v373
    %v664 = vunpack.c.h.b16 %v373
    %v665 = vunpack.c.l.b16 %v374
    %v666 = vunpack.c.h.b16 %v374
    %v667 = vunpack.c.l.b16 %v375
    %v668 = vunpack.c.h.b16 %v375
    %v669 = vunpack.c.l.b16 %v376
    %v670 = vunpack.c.h.b16 %v376
    %v671 = vunpack.c.l.b16 %v377
    %v672 = vunpack.c.h.b16 %v377
    %v673 = vunpack.c.l.b16 %v378
    %v674 = vunpack.c.h.b16 %v378
    %v675 = vunpack.c.l.b16 %v379
    %v676 = vunpack.c.h.b16 %v379
    %v677 = vunpack.c.l.b16 %v380
    %v678 = vunpack.c.h.b16 %v380
    %v679 = vunpack.c.l.b16 %v381
    %v680 = vunpack.c.h.b16 %v381
    %v681 = vunpack.c.l.b16 %v382
    %v682 = vunpack.c.h.b16 %v382
    %v683 = vunpack.c.l.b16 %v383
    %v684 = vunpack.c.h.b16 %v383
    %v685 = vunpack.c.l.b16 %v384
    %v686 = vunpack.c.h.b16 %v384
    %v687 = vunpack.c.l.b16 %v385
    %v688 = vunpack.c.h.b16 %v385
    %v689 = vunpack.c.l.b16 %v386
    %v690 = vunpack.c.h.b16 %v386
    %v691 = vunpack.c.l.b16 %v387
    %v692 = vunpack.c.h.b16 %v387
    %v693 = vunpack.c.l.b16 %v388
    %v694 = vunpack.c.h.b16 %v388
    %v695 = vunpack.c.l.b16 %v389
    %v696 = vunpack.c.h.b16 %v389
    %v697 = vunpack.c.l.b16 %v390
    %v698 = vunpack.c.h.b16 %v390
    %v699 = vunpack.c.l.b16 %v391
    %v700 = vunpack.c.h.b16 %v391
    %v701 = vunpack.c.l.b16 %v392
    %v702 = vunpack.c.h.b16 %v392
    %v703 = vunpack.c.l.b16 %v393
    %v704 = vunpack.c.h.b16 %v393
    %v705 = vunpack.c.l.b16 %v394
    %v706 = vunpack.c.h.b16 %v394
    %v707 = vunpack.c.l.b16 %v395
    %v708 = vunpack.c.h.b16 %v395
    %v709 = vunpack.c.l.b16 %v396
    %v710 = vunpack.c.h.b16 %v396
    %v711 = vunpack.c.l.b16 %v397
    %v712 = vunpack.c.h.b16 %v397
    %v713 = vunpack.c.l.b16 %v398
    %v714 = vunpack.c.h.b16 %v398
    %v715 = vunpack.c.l.b16 %v399
    %v716 = vunpack.c.h.b16 %v399
    %v717 = vunpack.c.l.b16 %v400
    %v718 = vunpack.c.h.b16 %v400
    %v719 = vunpack.c.l.b16 %v401
    %v720 = vunpack.c.h.b16 %v401
    %v721 = vunpack.c.l.b16 %v402
    %v722 = vunpack.c.h.b16 %v402
    %v723 = vunpack.c.l.b16 %v403
    %v724 = vunpack.c.h.b16 %v403
    %v725 = vunpack.c.l.b16 %v404
    %v726 = vunpack.c.h.b16 %v404
    %v727 = vunpack.c.l.b16 %v405
    %v728 = vunpack.c.h.b16 %v405
    %v729 = vunpack.c.l.b16 %v406
    %v730 = vunpack.c.h.b16 %v406
    %v731 = vunpack.c.l.b16 %v407
    %v732 = vunpack.c.h.b16 %v407
    %v733 = vunpack.c.l.b16 %v408
    %v734 = vunpack.c.h.b16 %v408
    %v735 = vunpack.c.l.b16 %v409
    %v736 = vunpack.c.h.b16 %v409
    %v737 = vunpack.c.l.b16 %v410
    %v738 = vunpack.c.h.b16 %v410
    %v739 = vunpack.c.l.b16 %v411
    %v740 = vunpack.c.h.b16 %v411
    %v741 = vunpack.c.l.b16 %v412
    %v742 = vunpack.c.h.b16 %v412
    %v743 = vunpack.c.l.b16 %v413
    %v744 = vunpack.c.h.b16 %v413
    %v745 = vunpack.c.l.b16 %v414
    %v746 = vunpack.c.h.b16 %v414
    %v747 = vunpack.c.l.b16 %v415
    %v748 = vunpack.c.h.b16 %v415
    %v749 = vunpack.c.l.b16 %v416
    %v750 = vunpack.c.h.b16 %v416
    %v751 = vunpack.c.l.b16 %v417
    %v752 = vunpack.c.h.b16 %v417
    %v753 = vunpack.c.l.b16 %v418
    %v754 = vunpack.c.h.b16 %v418
    %v755 = vunpack.c.l.b16 %v419
    %v756 = vunpack.c.h.b16 %v419
    %v757 = vunpack.c.l.b16 %v420
    %v758 = vunpack.c.h.b16 %v420
    %v759 = vunpack.c.l.b16 %v421
    %v760 = vunpack.c.h.b16 %v421
    %v761 = vunpack.c.l.b16 %v422
    %v762 = vunpack.c.h.b16 %v422
    %v763 = vunpack.c.l.b16 %v423
    %v764 = vunpack.c.h.b16 %v423
    %v765 = vunpack.c.l.b16 %v424
    %v766 = vunpack.c.h.b16 %v424
    %v767 = vunpack.c.l.b16 %v425
    %v768 = vunpack.c.h.b16 %v425
    %v769 = vunpack.c.l.b16 %v426
    %v770 = vunpack.c.h.b16 %v426
    %v771 = vunpack.c.l.b16 %v427
    %v772 = vunpack.c.h.b16 %v427
    %v773 = vunpack.c.l.b16 %v428
    %v774 = vunpack.c.h.b16 %v428
    %v775 = vunpack.c.l.b16 %v429
    %v776 = vunpack.c.h.b16 %v429
    %v777 = vunpack.c.l.b16 %v430
    %v778 = vunpack.c.h.b16 %v430
    %v779 = vunpack.c.l.b16 %v431
    %v780 = vunpack.c.h.b16 %v431
    %v781 = vunpack.c.l.b16 %v432
    %v782 = vunpack.c.h.b16 %v432
    %v783 = vunpack.c.l.b16 %v433
    %v784 = vunpack.c.h.b16 %v433
    %v785 = vunpack.c.l.b16 %v434
    %v786 = vunpack.c.h.b16 %v434
    %v787 = vunpack.c.l.b16 %v435
    %v788 = vunpack.c.h.b16 %v435
    %v789 = vunpack.c.l.b16 %v436
    %v790 = vunpack.c.h.b16 %v436
    %v791 = vunpack.c.l.b16 %v437
    %v792 = vunpack.c.h.b16 %v437
    %v793 = vunpack.c.l.b16 %v438
    %v794 = vunpack.c.h.b16 %v438
    %v795 = vunpack.c.l.b16 %v439
    %v796 = vunpack.c.h.b16 %v439
    %v797 = vunpack.c.l.b16 %v440
    %v798 = vunpack.c.h.b16 %v440
    %v799 = vunpack.c.l.b16 %v441
    %v800 = vunpack.c.h.b16 %v441
    %v801 = vunpack.c.l.b16 %v442
    %v802 = vunpack.c.h.b16 %v442
    %v803 = vunpack.c.l.b16 %v443
    %v804 = vunpack.c.h.b16 %v443
    %v805 = vunpack.c.l.b16 %v444
    %v806 = vunpack.c.h.b16 %v444
    %v807 = vunpack.c.l.b16 %v445
    %v808 = vunpack.c.h.b16 %v445
    %v809 = vunpack.c.l.b16 %v446
    %v810 = vunpack.c.h.b16 %v446
    %v811 = vunpack.c.l.b16 %v447
    %v812 = vunpack.c.h.b16 %v447
    %v813 = vunpack.c.l.b16 %v448
    %v814 = vunpack.c.h.b16 %v448
    %v815 = vunpack.c.l.b16 %v449
    %v816 = vunpack.c.h.b16 %v449
    %v817 = vunpack.c.l.b16 %v450
    %v818 = vunpack.c.h.b16 %v450
    %v819 = vunpack.c.l.b16 %v451
    %v820 = vunpack.c.h.b16 %v451
    %v821 = vunpack.c.l.b16 %v452
    %v822 = vunpack.c.h.b16 %v452
    %v823 = vunpack.c.l.b16 %v453
    %v824 = vunpack.c.h.b16 %v453
    %v825 = vunpack.c.l.b16 %v454
    %v826 = vunpack.c.h.b16 %v454
    %v827 = vunpack.c.l.b16 %v455
    %v828 = vunpack.c.h.b16 %v455
    %v829 = vunpack.c.l.b16 %v456
    %v830 = vunpack.c.h.b16 %v456
    %v831 = vunpack.c.l.b16 %v457
    %v832 = vunpack.c.h.b16 %v457
    %v833 = vunpack.c.l.b16 %v458
    %v834 = vunpack.c.h.b16 %v458
    %v835 = vunpack.c.l.b16 %v459
    %v836 = vunpack.c.h.b16 %v459
    %v837 = vunpack.c.l.b16 %v460
    %v838 = vunpack.c.h.b16 %v460
    %v839 = vunpack.c.l.b16 %v461
    %v840 = vunpack.c.h.b16 %v461
    %v841 = vunpack.c.l.b16 %v462
    %v842 = vunpack.c.h.b16 %v462
    %v843 = vunpack.c.l.b16 %v463
    %v844 = vunpack.c.h.b16 %v463
    %v845 = vunpack.c.l.b16 %v464
    %v846 = vunpack.c.h.b16 %v464
    %v847 = vunpack.c.l.b16 %v465
    %v848 = vunpack.c.h.b16 %v465
    %v849 = vunpack.c.l.b16 %v466
    %v850 = vunpack.c.h.b16 %v466
    %v851 = vunpack.c.l.b16 %v467
    %v852 = vunpack.c.h.b16 %v467
    %v853 = vunpack.c.l.b16 %v468
    %v854 = vunpack.c.h.b16 %v468
    %v855 = vunpack.c.l.b16 %v469
    %v856 = vunpack.c.h.b16 %v469
    %v857 = vunpack.c.l.b16 %v470
    %v858 = vunpack.c.h.b16 %v470
    %v859 = vunpack.c.l.b16 %v471
    %v860 = vunpack.c.h.b16 %v471
    %v861 = vunpack.c.l.b16 %v472
    %v862 = vunpack.c.h.b16 %v472
    %v863 = vunpack.c.l.b16 %v473
    %v864 = vunpack.c.h.b16 %v473
    %v865 = vunpack.c.l.b16 %v474
    %v866 = vunpack.c.h.b16 %v474
    %v867 = vunpack.c.l.b16 %v475
    %v868 = vunpack.c.h.b16 %v475
    %v869 = vunpack.c.l.b16 %v476
    %v870 = vunpack.c.h.b16 %v476
    %v871 = vunpack.c.l.b16 %v477
    %v872 = vunpack.c.h.b16 %v477
    %v873 = vunpack.c.l.b16 %v478
    %v874 = vunpack.c.h.b16 %v478
    %v875 = vpack.c.b16 %v621, %v619
    %v876 = vpack.c.b16 %v622, %v620
    %v877 = vpack.c.b16 %v625, %v623
    %v878 = vpack.c.b16 %v626, %v624
    %v879 = vpack.c.b16 %v629, %v627
    %v880 = vpack.c.b16 %v630, %v628
    %v881 = vpack.c.b16 %v633, %v631
    %v882 = vpack.c.b16 %v634, %v632
    %v883 = vpack.c.b16 %v637, %v635
    %v884 = vpack.c.b16 %v638, %v636
    %v885 = vpack.c.b16 %v641, %v639
    %v886 = vpack.c.b16 %v642, %v640
    %v887 = vpack.c.b16 %v645, %v643
    %v888 = vpack.c.b16 %v646, %v644
    %v889 = vpack.c.b16 %v649, %v647
    %v890 = vpack.c.b16 %v650, %v648
    %v891 = vpack.c.b16 %v653, %v651
    %v892 = vpack.c.b16 %v654, %v652
    %v893 = vpack.c.b16 %v657, %v655
    %v894 = vpack.c.b16 %v658, %v656
    %v895 = vpack.c.b16 %v661, %v659
    %v896 = vpack.c.b16 %v662, %v660
    %v897 = vpack.c.b16 %v665, %v663
    %v898 = vpack.c.b16 %v666, %v664
    %v899 = vpack.c.b16 %v669, %v667
    %v900 = vpack.c.b16 %v670, %v668
    %v901 = vpack.c.b16 %v673, %v671
    %v902 = vpack.c.b16 %v674, %v672
    %v903 = vpack.c.b16 %v677, %v675
    %v904 = vpack.c.b16 %v678, %v676
    %v905 = vpack.c.b16 %v681, %v679
    %v906 = vpack.c.b16 %v682, %v680
    %v907 = vpack.c.b16 %v685, %v683
    %v908 = vpack.c.b16 %v686, %v684
    %v909 = vpack.c.b16 %v689, %v687
    %v910 = vpack.c.b16 %v690, %v688
    %v911 = vpack.c.b16 %v693, %v691
    %v912 = vpack.c.b16 %v694, %v692
    %v913 = vpack.c.b16 %v697, %v695
    %v914 = vpack.c.b16 %v698, %v696
    %v915 = vpack.c.b16 %v701, %v699
    %v916 = vpack.c.b16 %v702, %v700
    %v917 = vpack.c.b16 %v705, %v703
    %v918 = vpack.c.b16 %v706, %v704
    %v919 = vpack.c.b16 %v709, %v707
    %v920 = vpack.c.b16 %v710, %v708
    %v921 = vpack.c.b16 %v713, %v711
    %v922 = vpack.c.b16 %v714, %v712
    %v923 = vpack.c.b16 %v717, %v715
    %v924 = vpack.c.b16 %v718, %v716
    %v925 = vpack.c.b16 %v721, %v719
    %v926 = vpack.c.b16 %v722, %v720
    %v927 = vpack.c.b16 %v725, %v723
    %v928 = vpack.c.b16 %v726, %v724
    %v929 = vpack.c.b16 %v729, %v727
    %v930 = vpack.c.b16 %v730, %v728
    %v931 = vpack.c.b16 %v733, %v731
    %v932 = vpack.c.b16 %v734, %v732
    %v933 = vpack.c.b16 %v737, %v735
    %v934 = vpack.c.b16 %v738, %v736
    %v935 = vpack.c.b16 %v741, %v739
    %v936 = vpack.c.b16 %v742, %v740
    %v937 = vpack.c.b16 %v745, %v743
    %v938 = vpack.c.b16 %v746, %v744
    %v939 = vpack.c.b16 %v749, %v747
    %v940 = vpack.c.b16 %v750, %v748
    %v941 = vpack.c.b16 %v753, %v751
    %v942 = vpack.c.b16 %v754, %v752
    %v943 = vpack.c.b16 %v757, %v755
    %v944 = vpack.c.b16 %v758, %v756
    %v945 = vpack.c.b16 %v761, %v759
    %v946 = vpack.c.b16 %v762, %v760
    %v947 = vpack.c.b16 %v765, %v763
    %v948 = vpack.c.b16 %v766, %v764
    %v949 = vpack.c.b16 %v769, %v767
    %v950 = vpack.c.b16 %v770, %v768
    %v951 = vpack.c.b16 %v773, %v771
    %v952 = vpack.c.b16 %v774, %v772
    %v953 = vpack.c.b16 %v777, %v775
    %v954 = vpack.c.b16 %v778, %v776
    %v955 = vpack.c.b16 %v781, %v779
    %v956 = vpack.c.b16 %v782, %v780
    %v957 = vpack.c.b16 %v785, %v783
    %v958 = vpack.c.b16 %v786, %v784
    %v959 = vpack.c.b16 %v789, %v787
    %v960 = vpack.c.b16 %v790, %v788
    %v961 = vpack.c.b16 %v793, %v791
    %v962 = vpack.c.b16 %v794, %v792
    %v963 = vpack.c.b16 %v797, %v795
    %v964 = vpack.c.b16 %v798, %v796
    %v965 = vpack.c.b16 %v801, %v799
    %v966 = vpack.c.b16 %v802, %v800
    %v967 = vpack.c.b16 %v805, %v803
    %v968 = vpack.c.b16 %v806, %v804
    %v969 = vpack.c.b16 %v809, %v807
    %v970 = vpack.c.b16 %v810, %v808
    %v971 = vpack.c.b16 %v813, %v811
    %v972 = vpack.c.b16 %v814, %v812
    %v973 = vpack.c.b16 %v817, %v815
    %v974 = vpack.c.b16 %v818, %v816
    %v975 = vpack.c.b16 %v821, %v819
    %v976 = vpack.c.b16 %v822, %v820
    %v977 = vpack.c.b16 %v825, %v823
    %v978 = vpack.c.b16 %v826, %v824
    %v979 = vpack.c.b16 %v829, %v827
    %v980 = vpack.c.b16 %v830, %v828
    %v981 = vpack.c.b16 %v833, %v831
    %v982 = vpack.c.b16 %v834, %v832
    %v983 = vpack.c.b16 %v837, %v835
    %v984 = vpack.c.b16 %v838, %v836
    %v985 = vpack.c.b16 %v841, %v839
    %v986 = vpack.c.b16 %v842, %v840
    %v987 = vpack.c.b16 %v845, %v843
    %v988 = vpack.c.b16 %v846, %v844
    %v989 = vpack.c.b16 %v849, %v847
    %v990 = vpack.c.b16 %v850, %v848
    %v991 = vpack.c.b16 %v853, %v851
    %v992 = vpack.c.b16 %v854, %v852
    %v993 = vpack.c.b16 %v857, %v855
    %v994 = vpack.c.b16 %v858, %v856
    %v995 = vpack.c.b16 %v861, %v859
    %v996 = vpack.c.b16 %v862, %v860
    %v997 = vpack.c.b16 %v865, %v863
    %v998 = vpack.c.b16 %v866, %v864
    %v999 = vpack.c.b16 %v869, %v867
    %v1000 = vpack.c.b16 %v870, %v868
    %v1001 = vpack.c.b16 %v873, %v871
    %v1002 = vpack.c.b16 %v874, %v872
    %1131 = vmatprep.subr.bf16.mxu0 %v890
    %1132 = vmatpush1.bf16.msra.mxu0 %v889
    %1133 = vmatprep.subr.bf16.mxu0 %v888
    %1134 = vmatpush1.bf16.msra.mxu0 %v887
    %1135 = vmatprep.subr.bf16.mxu0 %v886
    %1136 = vmatpush1.bf16.msra.mxu0 %v885
    %1137 = vmatprep.subr.bf16.mxu0 %v884
    %1138 = vmatpush1.bf16.msra.mxu0 %v883
    %1139 = vmatprep.subr.bf16.mxu0 %v882
    %1140 = vmatpush1.bf16.msra.mxu0 %v881
    %1141 = vmatprep.subr.bf16.mxu0 %v880
    %1142 = vmatpush1.bf16.msra.mxu0 %v879
    %1143 = vmatprep.subr.bf16.mxu0 %v878
    %1144 = vmatpush1.bf16.msra.mxu0 %v877
    %1145 = vmatprep.subr.bf16.mxu0 %v876
    %1146 = vmatpush1.bf16.msra.mxu0 %v875
    %1147 = vmatprep.subr.bf16.mxu0 %v906
    %1148 = vmatpush2.bf16.msra.mxu0 %v905
    %1149 = vmatprep.subr.bf16.mxu0 %v904
    %1150 = vmatpush2.bf16.msra.mxu0 %v903
    %1151 = vmatprep.subr.bf16.mxu0 %v902
    %1152 = vmatpush2.bf16.msra.mxu0 %v901
    %1153 = vmatprep.subr.bf16.mxu0 %v900
    %1154 = vmatpush2.bf16.msra.mxu0 %v899
    %1155 = vmatprep.subr.bf16.mxu0 %v898
    %1156 = vmatpush2.bf16.msra.mxu0 %v897
    %1157 = vmatprep.subr.bf16.mxu0 %v896
    %1158 = vmatpush2.bf16.msra.mxu0 %v895
    %1159 = vmatprep.subr.bf16.mxu0 %v894
    %1160 = vmatpush2.bf16.msra.mxu0 %v893
    %1161 = vmatprep.subr.bf16.mxu0 %v892
    %1162 = vmatpush2.bf16.msra.mxu0 %v891
    %1163 = vmatprep.mubr.bf16.mxu0 %v344
    %1164 = vmatmul.mubr.bf16.gmra.mxu0 %v343
    %v1165 = vpop.f32.mrf.mxu0
    %v1166 = vadd.f32 %v484, %v1165
    %v1167 = vpop.f32.mrf.mxu0
    %v1168 = vadd.f32 %v488, %v1167
    %v1169 = vpop.f32.mrf.mxu0
    %v1170 = vadd.f32 %v484, %v1169
    %v1171 = vpop.f32.mrf.mxu0
    %v1172 = vadd.f32 %v488, %v1171
    %1173 = vdwg.mxu0
    %1174 = vmatprep.subr.bf16.mxu0 %v922
    %1175 = vmatpush1.bf16.msra.mxu0 %v921
    %1176 = vmatprep.subr.bf16.mxu0 %v920
    %1177 = vmatpush1.bf16.msra.mxu0 %v919
    %1178 = vmatprep.subr.bf16.mxu0 %v918
    %1179 = vmatpush1.bf16.msra.mxu0 %v917
    %1180 = vmatprep.subr.bf16.mxu0 %v916
    %1181 = vmatpush1.bf16.msra.mxu0 %v915
    %1182 = vmatprep.subr.bf16.mxu0 %v914
    %1183 = vmatpush1.bf16.msra.mxu0 %v913
    %1184 = vmatprep.subr.bf16.mxu0 %v912
    %1185 = vmatpush1.bf16.msra.mxu0 %v911
    %1186 = vmatprep.subr.bf16.mxu0 %v910
    %1187 = vmatpush1.bf16.msra.mxu0 %v909
    %1188 = vmatprep.subr.bf16.mxu0 %v908
    %1189 = vmatpush1.bf16.msra.mxu0 %v907
    %1190 = vmatprep.subr.bf16.mxu0 %v938
    %1191 = vmatpush2.bf16.msra.mxu0 %v937
    %1192 = vmatprep.subr.bf16.mxu0 %v936
    %1193 = vmatpush2.bf16.msra.mxu0 %v935
    %1194 = vmatprep.subr.bf16.mxu0 %v934
    %1195 = vmatpush2.bf16.msra.mxu0 %v933
    %1196 = vmatprep.subr.bf16.mxu0 %v932
    %1197 = vmatpush2.bf16.msra.mxu0 %v931
    %1198 = vmatprep.subr.bf16.mxu0 %v930
    %1199 = vmatpush2.bf16.msra.mxu0 %v929
    %1200 = vmatprep.subr.bf16.mxu0 %v928
    %1201 = vmatpush2.bf16.msra.mxu0 %v927
    %1202 = vmatprep.subr.bf16.mxu0 %v926
    %1203 = vmatpush2.bf16.msra.mxu0 %v925
    %1204 = vmatprep.subr.bf16.mxu0 %v924
    %1205 = vmatpush2.bf16.msra.mxu0 %v923
    %1206 = vmatprep.mubr.bf16.mxu0 %v346
    %1207 = vmatmul.mubr.bf16.gmra.mxu0 %v345
    %v1208 = vpop.f32.mrf.mxu0
    %v1209 = vadd.f32 %v1166, %v1208
    %v1210 = vpop.f32.mrf.mxu0
    %v1211 = vadd.f32 %v1168, %v1210
    %v1212 = vpop.f32.mrf.mxu0
    %v1213 = vadd.f32 %v1170, %v1212
    %v1214 = vpop.f32.mrf.mxu0
    %v1215 = vadd.f32 %v1172, %v1214
    %1216 = vdwg.mxu0
    %1217 = vmatprep.subr.bf16.mxu0 %v954
    %1218 = vmatpush1.bf16.msra.mxu0 %v953
    %1219 = vmatprep.subr.bf16.mxu0 %v952
    %1220 = vmatpush1.bf16.msra.mxu0 %v951
    %1221 = vmatprep.subr.bf16.mxu0 %v950
    %1222 = vmatpush1.bf16.msra.mxu0 %v949
    %1223 = vmatprep.subr.bf16.mxu0 %v948
    %1224 = vmatpush1.bf16.msra.mxu0 %v947
    %1225 = vmatprep.subr.bf16.mxu0 %v946
    %1226 = vmatpush1.bf16.msra.mxu0 %v945
    %1227 = vmatprep.subr.bf16.mxu0 %v944
    %1228 = vmatpush1.bf16.msra.mxu0 %v943
    %1229 = vmatprep.subr.bf16.mxu0 %v942
    %1230 = vmatpush1.bf16.msra.mxu0 %v941
    %1231 = vmatprep.subr.bf16.mxu0 %v940
    %1232 = vmatpush1.bf16.msra.mxu0 %v939
    %1233 = vmatprep.subr.bf16.mxu0 %v970
    %1234 = vmatpush2.bf16.msra.mxu0 %v969
    %1235 = vmatprep.subr.bf16.mxu0 %v968
    %1236 = vmatpush2.bf16.msra.mxu0 %v967
    %1237 = vmatprep.subr.bf16.mxu0 %v966
    %1238 = vmatpush2.bf16.msra.mxu0 %v965
    %1239 = vmatprep.subr.bf16.mxu0 %v964
    %1240 = vmatpush2.bf16.msra.mxu0 %v963
    %1241 = vmatprep.subr.bf16.mxu0 %v962
    %1242 = vmatpush2.bf16.msra.mxu0 %v961
    %1243 = vmatprep.subr.bf16.mxu0 %v960
    %1244 = vmatpush2.bf16.msra.mxu0 %v959
    %1245 = vmatprep.subr.bf16.mxu0 %v958
    %1246 = vmatpush2.bf16.msra.mxu0 %v957
    %1247 = vmatprep.subr.bf16.mxu0 %v956
    %1248 = vmatpush2.bf16.msra.mxu0 %v955
    %1249 = vmatprep.mubr.bf16.mxu0 %v348
    %1250 = vmatmul.mubr.bf16.gmra.mxu0 %v347
    %v1251 = vpop.f32.mrf.mxu0
    %v1252 = vadd.f32 %v1209, %v1251
    %v1253 = vpop.f32.mrf.mxu0
    %v1254 = vadd.f32 %v1211, %v1253
    %v1255 = vpop.f32.mrf.mxu0
    %v1256 = vadd.f32 %v1213, %v1255
    %v1257 = vpop.f32.mrf.mxu0
    %v1258 = vadd.f32 %v1215, %v1257
    %1259 = vdwg.mxu0
    %1260 = vmatprep.subr.bf16.mxu0 %v986
    %1261 = vmatpush1.bf16.msra.mxu0 %v985
    %1262 = vmatprep.subr.bf16.mxu0 %v984
    %1263 = vmatpush1.bf16.msra.mxu0 %v983
    %1264 = vmatprep.subr.bf16.mxu0 %v982
    %1265 = vmatpush1.bf16.msra.mxu0 %v981
    %1266 = vmatprep.subr.bf16.mxu0 %v980
    %1267 = vmatpush1.bf16.msra.mxu0 %v979
    %1268 = vmatprep.subr.bf16.mxu0 %v978
    %1269 = vmatpush1.bf16.msra.mxu0 %v977
    %1270 = vmatprep.subr.bf16.mxu0 %v976
    %1271 = vmatpush1.bf16.msra.mxu0 %v975
    %1272 = vmatprep.subr.bf16.mxu0 %v974
    %1273 = vmatpush1.bf16.msra.mxu0 %v973
    %1274 = vmatprep.subr.bf16.mxu0 %v972
    %1275 = vmatpush1.bf16.msra.mxu0 %v971
    %1276 = vmatprep.subr.bf16.mxu0 %v1002
    %1277 = vmatpush2.bf16.msra.mxu0 %v1001
    %1278 = vmatprep.subr.bf16.mxu0 %v1000
    %1279 = vmatpush2.bf16.msra.mxu0 %v999
    %1280 = vmatprep.subr.bf16.mxu0 %v998
    %1281 = vmatpush2.bf16.msra.mxu0 %v997
    %1282 = vmatprep.subr.bf16.mxu0 %v996
    %1283 = vmatpush2.bf16.msra.mxu0 %v995
    %1284 = vmatprep.subr.bf16.mxu0 %v994
    %1285 = vmatpush2.bf16.msra.mxu0 %v993
    %1286 = vmatprep.subr.bf16.mxu0 %v992
    %1287 = vmatpush2.bf16.msra.mxu0 %v991
    %1288 = vmatprep.subr.bf16.mxu0 %v990
    %1289 = vmatpush2.bf16.msra.mxu0 %v989
    %1290 = vmatprep.subr.bf16.mxu0 %v988
    %1291 = vmatpush2.bf16.msra.mxu0 %v987
    %1292 = vmatprep.mubr.bf16.mxu0 %v350
    %1293 = vmatmul.mubr.bf16.gmra.mxu0 %v349
    %v1294 = vpop.f32.mrf.mxu0
    %v1295 = vadd.f32 %v1252, %v1294
    %v1296 = vpop.f32.mrf.mxu0
    %v1297 = vadd.f32 %v1254, %v1296
    %v1298 = vpop.f32.mrf.mxu0
    %v1299 = vadd.f32 %v1256, %v1298
    %v1300 = vpop.f32.mrf.mxu0
    %v1301 = vadd.f32 %v1258, %v1300
    %1302 = vdwg.mxu0
    %v1303 = vld [vmem:[%s5] sm:$0x3]
    %v1304 = vld [vmem:[%s6] sm:$0x3]
    %v1305 = vadd.f32 %v1295, %v1297
    %1306 = vadd.xlane.f32.xlu0 %v1305
    %v1307 = vpop.xlane.xlu0 %1306
    %v1308 = vadd.f32 %v1299, %v1301
    %1309 = vadd.xlane.f32.xlu0 %v1308
    %v1310 = vpop.xlane.xlu0 %1309
    %v1311 = vrcp.pop 256.0
    %v1312 = vmul.f32 %v1307, %v1311
    %v1313 = vmul.f32 %v1310, %v1311
    %v1314 = vsub.f32 %v1295, %v1312
    %v1315 = vsub.f32 %v1297, %v1312
    %v1316 = vsub.f32 %v1299, %v1313
    %v1317 = vsub.f32 %v1301, %v1313
    %v1318 = vmul.f32 %v1314, %v1314
    %v1319 = vmul.f32 %v1315, %v1315
    %v1320 = vmul.f32 %v1316, %v1316
    %v1321 = vmul.f32 %v1317, %v1317
    %v1322 = vadd.f32 %v1318, %v1319
    %1323 = vadd.xlane.f32.xlu0 %v1322
    %v1324 = vpop.xlane.xlu0 %1323
    %v1325 = vadd.f32 %v1320, %v1321
    %1326 = vadd.xlane.f32.xlu0 %v1325
    %v1327 = vpop.xlane.xlu0 %1326
    %v1328 = vmul.f32 %v1324, %v1311
    %v1329 = vmul.f32 %v1327, %v1311
    %v1330 = vadd.f32 %v1328, 1e-05
    %v1331 = vadd.f32 %v1329, 1e-05
    %v1332 = vrsqrt.pop %v1330
    %v1333 = vrsqrt.pop %v1331
    %v1334 = vmul.f32 %v1314, %v1332
    %v1335 = vmul.f32 %v1315, %v1332
    %v1336 = vmul.f32 %v1316, %v1333
    %v1337 = vmul.f32 %v1317, %v1333
    %v1339 = vlaneseq
    %v1340 = vshrl.u32 %v1339, 7
    %v1341 = vsub.s32 0, %v1340
    %v1342 = vrot.slane %v1303, %v1341
    %v1343 = vlaneseq
    %v1344 = vshrl.u32 %v1343, 7
    %v1345 = vsub.s32 1, %v1344
    %v1346 = vrot.slane %v1303, %v1345
    %v1349 = vmul.f32 %v1334, %v1342
    %v1350 = vmul.f32 %v1335, %v1346
    %v1351 = vmul.f32 %v1336, %v1342
    %v1352 = vmul.f32 %v1337, %v1346
    %v1354 = vlaneseq
    %v1355 = vshrl.u32 %v1354, 7
    %v1356 = vsub.s32 0, %v1355
    %v1357 = vrot.slane %v1304, %v1356
    %v1358 = vlaneseq
    %v1359 = vshrl.u32 %v1358, 7
    %v1360 = vsub.s32 1, %v1359
    %v1361 = vrot.slane %v1304, %v1360
    %v1364 = vadd.f32 %v1349, %v1357
    %v1365 = vadd.f32 %v1350, %v1361
    %v1366 = vadd.f32 %v1351, %v1357
    %v1367 = vadd.f32 %v1352, %v1361
    %v1368 = vpack.c.bf16 %v1366, %v1364
    %v1369 = vpack.c.bf16 %v1367, %v1365
    %v1370 = vld [vmem:[#allocation10] sm:$0xf]
    %v1371 = vld [vmem:[#allocation10 + $0x4] sm:$0xf]
    %v1372 = vld [vmem:[#allocation10 + $0x8] sm:$0xf]
    %v1373 = vld [vmem:[#allocation10 + $0xc] sm:$0xf]
    %v1374 = vld [vmem:[#allocation10 + $0x10] sm:$0xf]
    %v1375 = vld [vmem:[#allocation10 + $0x14] sm:$0xf]
    %v1376 = vld [vmem:[#allocation10 + $0x18] sm:$0xf]
    %v1377 = vld [vmem:[#allocation10 + $0x1c] sm:$0xf]
    %v1378 = vld [vmem:[#allocation10 + $0x20] sm:$0xf]
    %v1379 = vld [vmem:[#allocation10 + $0x24] sm:$0xf]
    %v1380 = vld [vmem:[#allocation10 + $0x28] sm:$0xf]
    %v1381 = vld [vmem:[#allocation10 + $0x2c] sm:$0xf]
    %v1382 = vld [vmem:[#allocation10 + $0x30] sm:$0xf]
    %v1383 = vld [vmem:[#allocation10 + $0x34] sm:$0xf]
    %v1384 = vld [vmem:[#allocation10 + $0x38] sm:$0xf]
    %v1385 = vld [vmem:[#allocation10 + $0x3c] sm:$0xf]
    %v1386 = vld [vmem:[#allocation10 + $0x40] sm:$0xf]
    %v1387 = vld [vmem:[#allocation10 + $0x44] sm:$0xf]
    %v1388 = vld [vmem:[#allocation10 + $0x48] sm:$0xf]
    %v1389 = vld [vmem:[#allocation10 + $0x4c] sm:$0xf]
    %v1390 = vld [vmem:[#allocation10 + $0x50] sm:$0xf]
    %v1391 = vld [vmem:[#allocation10 + $0x54] sm:$0xf]
    %v1392 = vld [vmem:[#allocation10 + $0x58] sm:$0xf]
    %v1393 = vld [vmem:[#allocation10 + $0x5c] sm:$0xf]
    %v1394 = vld [vmem:[#allocation10 + $0x60] sm:$0xf]
    %v1395 = vld [vmem:[#allocation10 + $0x64] sm:$0xf]
    %v1396 = vld [vmem:[#allocation10 + $0x68] sm:$0xf]
    %v1397 = vld [vmem:[#allocation10 + $0x6c] sm:$0xf]
    %v1398 = vld [vmem:[#allocation10 + $0x70] sm:$0xf]
    %v1399 = vld [vmem:[#allocation10 + $0x74] sm:$0xf]
    %v1400 = vld [vmem:[#allocation10 + $0x78] sm:$0xf]
    %v1401 = vld [vmem:[#allocation10 + $0x7c] sm:$0xf]
    %v1402 = vld [vmem:[%s8] sm:$0x1]
    %v1404 = vlaneseq
    %v1405 = vshrl.u32 %v1404, 7
    %v1406 = vsub.s32 0, %v1405
    %v1407 = vrot.slane %v1402, %v1406
    %v1441 = vunpack.c.l.b16 %v1370
    %v1442 = vunpack.c.l.b16 %v1371
    %v1443 = vunpack.c.l.b16 %v1372
    %v1444 = vunpack.c.l.b16 %v1373
    %v1445 = vunpack.c.l.b16 %v1374
    %v1446 = vunpack.c.l.b16 %v1375
    %v1447 = vunpack.c.l.b16 %v1376
    %v1448 = vunpack.c.l.b16 %v1377
    %v1449 = vunpack.c.l.b16 %v1378
    %v1450 = vunpack.c.l.b16 %v1379
    %v1451 = vunpack.c.l.b16 %v1380
    %v1452 = vunpack.c.l.b16 %v1381
    %v1453 = vunpack.c.l.b16 %v1382
    %v1454 = vunpack.c.l.b16 %v1383
    %v1455 = vunpack.c.l.b16 %v1384
    %v1456 = vunpack.c.l.b16 %v1385
    %v1457 = vunpack.c.l.b16 %v1386
    %v1458 = vunpack.c.l.b16 %v1387
    %v1459 = vunpack.c.l.b16 %v1388
    %v1460 = vunpack.c.l.b16 %v1389
    %v1461 = vunpack.c.l.b16 %v1390
    %v1462 = vunpack.c.l.b16 %v1391
    %v1463 = vunpack.c.l.b16 %v1392
    %v1464 = vunpack.c.l.b16 %v1393
    %v1465 = vunpack.c.l.b16 %v1394
    %v1466 = vunpack.c.l.b16 %v1395
    %v1467 = vunpack.c.l.b16 %v1396
    %v1468 = vunpack.c.l.b16 %v1397
    %v1469 = vunpack.c.l.b16 %v1398
    %v1470 = vunpack.c.l.b16 %v1399
    %v1471 = vunpack.c.l.b16 %v1400
    %v1472 = vunpack.c.l.b16 %v1401
    %v1473 = vpack.c.b16 %v1442, %v1441
    %v1474 = vpack.c.b16 %v1444, %v1443
    %v1475 = vpack.c.b16 %v1446, %v1445
    %v1476 = vpack.c.b16 %v1448, %v1447
    %v1477 = vpack.c.b16 %v1450, %v1449
    %v1478 = vpack.c.b16 %v1452, %v1451
    %v1479 = vpack.c.b16 %v1454, %v1453
    %v1480 = vpack.c.b16 %v1456, %v1455
    %v1481 = vpack.c.b16 %v1458, %v1457
    %v1482 = vpack.c.b16 %v1460, %v1459
    %v1483 = vpack.c.b16 %v1462, %v1461
    %v1484 = vpack.c.b16 %v1464, %v1463
    %v1485 = vpack.c.b16 %v1466, %v1465
    %v1486 = vpack.c.b16 %v1468, %v1467
    %v1487 = vpack.c.b16 %v1470, %v1469
    %v1488 = vpack.c.b16 %v1472, %v1471
    %1505 = vmatprep.subr.bf16.mxu0 0
    %1506 = vmatpush1.bf16.msra.mxu0 %v1480
    %1507 = vmatprep.subr.bf16.mxu0 0
    %1508 = vmatpush1.bf16.msra.mxu0 %v1479
    %1509 = vmatprep.subr.bf16.mxu0 0
    %1510 = vmatpush1.bf16.msra.mxu0 %v1478
    %1511 = vmatprep.subr.bf16.mxu0 0
    %1512 = vmatpush1.bf16.msra.mxu0 %v1477
    %1513 = vmatprep.subr.bf16.mxu0 0
    %1514 = vmatpush1.bf16.msra.mxu0 %v1476
    %1515 = vmatprep.subr.bf16.mxu0 0
    %1516 = vmatpush1.bf16.msra.mxu0 %v1475
    %1517 = vmatprep.subr.bf16.mxu0 0
    %1518 = vmatpush1.bf16.msra.mxu0 %v1474
    %1519 = vmatprep.subr.bf16.mxu0 0
    %1520 = vmatpush1.bf16.msra.mxu0 %v1473
    %1521 = vmatprep.subr.bf16.mxu0 0
    %1522 = vmatpush2.bf16.msra.mxu0 %v1488
    %1523 = vmatprep.subr.bf16.mxu0 0
    %1524 = vmatpush2.bf16.msra.mxu0 %v1487
    %1525 = vmatprep.subr.bf16.mxu0 0
    %1526 = vmatpush2.bf16.msra.mxu0 %v1486
    %1527 = vmatprep.subr.bf16.mxu0 0
    %1528 = vmatpush2.bf16.msra.mxu0 %v1485
    %1529 = vmatprep.subr.bf16.mxu0 0
    %1530 = vmatpush2.bf16.msra.mxu0 %v1484
    %1531 = vmatprep.subr.bf16.mxu0 0
    %1532 = vmatpush2.bf16.msra.mxu0 %v1483
    %1533 = vmatprep.subr.bf16.mxu0 0
    %1534 = vmatpush2.bf16.msra.mxu0 %v1482
    %1535 = vmatprep.subr.bf16.mxu0 0
    %1536 = vmatpush2.bf16.msra.mxu0 %v1481
    %1537 = vmatprep.mubr.bf16.mxu0 %v1369
    %1538 = vmatmul.mubr.bf16.gmra.mxu0 %v1368
    %v1539 = vpop.f32.mrf.mxu0
    %v1540 = vadd.f32 %v1407, %v1539
    %v1541 = vpop.f32.mrf.mxu0
    %v1542 = vpop.f32.mrf.mxu0
    %v1543 = vadd.f32 %v1407, %v1542
    %v1544 = vpop.f32.mrf.mxu0
    %1545 = vdwg.mxu0
    %v1546 = vmax.f32 %v1540, 0.0
    %v1547 = vmax.f32 %v1543, 0.0
    %v1548 = vpack.c.bf16 %v1547, %v1546
    %v1549 = vld [vmem:[#allocation11] sm:$0xf]
    %v1550 = vld [vmem:[#allocation11 + $0x4] sm:$0xf]
    %v1551 = vld [vmem:[#allocation11 + $0x8] sm:$0xf]
    %v1552 = vld [vmem:[#allocation11 + $0xc] sm:$0xf]
    %v1553 = vld [vmem:[#allocation11 + $0x10] sm:$0xf]
    %v1554 = vld [vmem:[#allocation11 + $0x14] sm:$0xf]
    %v1555 = vld [vmem:[#allocation11 + $0x18] sm:$0xf]
    %v1556 = vld [vmem:[#allocation11 + $0x1c] sm:$0xf]
    %v1557 = vld [vmem:[#allocation11 + $0x20] sm:$0xf]
    %v1558 = vld [vmem:[#allocation11 + $0x24] sm:$0xf]
    %v1559 = vld [vmem:[#allocation11 + $0x28] sm:$0xf]
    %v1560 = vld [vmem:[#allocation11 + $0x2c] sm:$0xf]
    %v1561 = vld [vmem:[#allocation11 + $0x30] sm:$0xf]
    %v1562 = vld [vmem:[#allocation11 + $0x34] sm:$0xf]
    %v1563 = vld [vmem:[#allocation11 + $0x38] sm:$0xf]
    %v1564 = vld [vmem:[#allocation11 + $0x3c] sm:$0xf]
    %v1565 = vld [vmem:[%s10] sm:$0x1]
    %v1567 = vlaneseq
    %v1568 = vshrl.u32 %v1567, 7
    %v1569 = vsub.s32 0, %v1568
    %v1570 = vrot.slane %v1565, %v1569
    %v1588 = vunpack.c.l.b16 %v1549
    %v1589 = vunpack.c.l.b16 %v1550
    %v1590 = vunpack.c.l.b16 %v1551
    %v1591 = vunpack.c.l.b16 %v1552
    %v1592 = vunpack.c.l.b16 %v1553
    %v1593 = vunpack.c.l.b16 %v1554
    %v1594 = vunpack.c.l.b16 %v1555
    %v1595 = vunpack.c.l.b16 %v1556
    %v1596 = vunpack.c.l.b16 %v1557
    %v1597 = vunpack.c.l.b16 %v1558
    %v1598 = vunpack.c.l.b16 %v1559
    %v1599 = vunpack.c.l.b16 %v1560
    %v1600 = vunpack.c.l.b16 %v1561
    %v1601 = vunpack.c.l.b16 %v1562
    %v1602 = vunpack.c.l.b16 %v1563
    %v1603 = vunpack.c.l.b16 %v1564
    %v1604 = vpack.c.b16 %v1589, %v1588
    %v1605 = vpack.c.b16 %v1591, %v1590
    %v1606 = vpack.c.b16 %v1593, %v1592
    %v1607 = vpack.c.b16 %v1595, %v1594
    %v1608 = vpack.c.b16 %v1597, %v1596
    %v1609 = vpack.c.b16 %v1599, %v1598
    %v1610 = vpack.c.b16 %v1601, %v1600
    %v1611 = vpack.c.b16 %v1603, %v1602
    %1620 = vmatprep.subr.bf16.mxu0 0
    %1621 = vmatpush1.bf16.msra.mxu0 %v1611
    %1622 = vmatprep.subr.bf16.mxu0 0
    %1623 = vmatpush1.bf16.msra.mxu0 %v1610
    %1624 = vmatprep.subr.bf16.mxu0 0
    %1625 = vmatpush1.bf16.msra.mxu0 %v1609
    %1626 = vmatprep.subr.bf16.mxu0 0
    %1627 = vmatpush1.bf16.msra.mxu0 %v1608
    %1628 = vmatprep.subr.bf16.mxu0 0
    %1629 = vmatpush1.bf16.msra.mxu0 %v1607
    %1630 = vmatprep.subr.bf16.mxu0 0
    %1631 = vmatpush1.bf16.msra.mxu0 %v1606
    %1632 = vmatprep.subr.bf16.mxu0 0
    %1633 = vmatpush1.bf16.msra.mxu0 %v1605
    %1634 = vmatprep.subr.bf16.mxu0 0
    %1635 = vmatpush1.bf16.msra.mxu0 %v1604
    %1636 = vmatprep.subr.bf16.mxu0 0
    %1637 = vmatpush2.bf16.msra.mxu0 0
    %1638 = vmatprep.subr.bf16.mxu0 0
    %1639 = vmatpush2.bf16.msra.mxu0 0
    %1640 = vmatprep.subr.bf16.mxu0 0
    %1641 = vmatpush2.bf16.msra.mxu0 0
    %1642 = vmatprep.subr.bf16.mxu0 0
    %1643 = vmatpush2.bf16.msra.mxu0 0
    %1644 = vmatprep.subr.bf16.mxu0 0
    %1645 = vmatpush2.bf16.msra.mxu0 0
    %1646 = vmatprep.subr.bf16.mxu0 0
    %1647 = vmatpush2.bf16.msra.mxu0 0
    %1648 = vmatprep.subr.bf16.mxu0 0
    %1649 = vmatpush2.bf16.msra.mxu0 0
    %1650 = vmatprep.subr.bf16.mxu0 0
    %1651 = vmatpush2.bf16.msra.mxu0 0
    %1652 = vmatprep.mubr.bf16.mxu0 0
    %1653 = vmatmul.mubr.bf16.gmra.mxu0 %v1548
    %v1654 = vpop.f32.mrf.mxu0
    %v1655 = vadd.f32 %v1570, %v1654
    %v1656 = vpop.f32.mrf.mxu0
    %v1657 = vpop.f32.mrf.mxu0
    %v1658 = vadd.f32 %v1570, %v1657
    %v1659 = vpop.f32.mrf.mxu0
    %1660 = vdwg.mxu0
    %1661 = vst [vmem:[#allocation13] sm:$0xff] %v1655
    %1662 = vst [vmem:[#allocation13 + $0x8] sm:$0xff] %v1658
    // Predicated region
    $region70: #{tpu_custom_call.1} parent=1 // pred_check
      _
    $region71: #{tpu_custom_call.1} parent=1 // pred_check_branch
      %1664 = sbr.rel (0) target = $region73
    $region72: #{tpu_custom_call.1} parent=1 // pred_region
      %s1666 = ssub.s32 256, 256
      %1667 = vsyncadd [#allocation4], %s1666
      %s1668 = sshll.u32 [#allocation13], 4
      %s1669 = int_to_ptr.vmem [resolvable:$true] %s1668
      %1674 = dma.vmem_to_hbm [thread:$0]  %s1669, 256, %s11, [#allocation4], 128, 128, 8
    $region73: #{tpu_custom_call.1} parent=1 // pred_fallthru
      _
    // Predicated region
    $region74: #{tpu_custom_call.1} parent=1 // pred_check
      _
    $region75: #{tpu_custom_call.1} parent=1 // pred_check_branch
      %1676 = sbr.rel (0) target = $region77
    $region76: #{tpu_custom_call.1} parent=1 // pred_region
      %1677 = dma.done [#allocation4], 256
    $region77: #{tpu_custom_call.1} parent=1 // pred_fallthru
      _
    %1678 = vsyncpa [#allocation3], 1
    %1679 = vsyncpa [#allocation6], 1
    %1680 = vsyncpa [#allocation9], 1
    %1681 = vsyncpa [#allocation12], 1
    %1682 = vsyncpa [#allocation4], 1

</llo_original>
